<compile_context>
chip_gen: v7x
topology: tpu7x:2x2x1
jax: 0.10.0
libtpu: 0.0.40
codegen_flags: <defaults>
</compile_context>

<pallas_src>
import functools

import numpy as np
import jax
import jax.numpy as jnp
from jax import lax
from jax.experimental import pallas as pl
from jax.experimental.pallas import tpu as pltpu


# dot_general dimension numbers: contract dim 0 of both operands (lhs-transposed matmul).
_TN = (((0,), (0,)), ((), ()))


def _disc_loss_kernel(x_ref, t_ref, out_ref, *, l_pad, delta_var, delta_dist,
                      alpha, beta, gamma):
    f32 = jnp.float32
    nb_cls, num, _ = x_ref.shape

    # Shared, class-independent constants (built once, reused by every class).
    lab = jax.lax.broadcasted_iota(jnp.int32, (l_pad, num), 0) + 1          # (l_pad, num)
    rows_i = jax.lax.broadcasted_iota(jnp.int32, (l_pad, l_pad), 0)
    cols_i = jax.lax.broadcasted_iota(jnp.int32, (l_pad, l_pad), 1)
    margin = (2.0 * delta_dist) * (rows_i != cols_i).astype(f32)            # (l_pad, l_pad)
    # Per-cluster "far away" offsets used to neutralize absent clusters in the push term.
    big = 1e6 + 2.0 * delta_dist
    big_off = (jax.lax.broadcasted_iota(jnp.int32, (l_pad, 1), 0).astype(f32) + 1.0) * big

    for c in range(nb_cls):            # nb_cls is small & static -> unrolled
        x = x_ref[c]                   # (num, D) embeddings for this class
        t = t_ref[c]                   # (1, num) int32 labels, 0 = background

        # Cluster membership one-hot (single orientation).
        M = (lab == t).astype(f32)                                          # (l_pad, num)

        n_fg = jnp.sum((t > 0).astype(f32))                                 # scalar

        counts = jnp.sum(M, axis=1, keepdims=True)                          # (l_pad, 1)
        present = (counts > 0.0).astype(f32)                                # (l_pad, 1)
        inv_counts = pl.reciprocal(jnp.maximum(counts, 1.0), approx=True)   # (l_pad, 1)

        # scatter_mean equivalent: per-cluster sums / counts (absent rows are exactly 0).
        sums = jnp.dot(M, x, preferred_element_type=f32)                    # (l_pad, D)
        mean = sums * inv_counts                                            # (l_pad, D)

        # variance ("pull") term — gather each point's cluster mean with a TN matmul
        # (background / out-of-range points get 0 and are dropped again by M @ sub).
        mean_pp = lax.dot_general(M, mean, _TN, preferred_element_type=f32)  # (num, D)
        l1 = jnp.sum(jnp.abs(x - mean_pp), axis=1, keepdims=True)           # (num, 1)
        sub = jnp.maximum(l1 - delta_var, 0.0) ** 2                         # (num, 1)
        sum_sub = jnp.dot(M, sub, preferred_element_type=f32)               # (l_pad, 1)

        n_clusters = jnp.sum(present)
        c_safe = jnp.maximum(n_clusters, 1.0)
        var = jnp.sum(sum_sub * inv_counts) / c_safe

        # distance ("push") term — vectorized pairwise L1 between cluster means.
        # Absent clusters are moved far away so every pair involving one contributes 0.
        mean_d = mean + (1.0 - present) * big_off                           # (l_pad, D)
        diffsum = jnp.sum(jnp.abs(mean_d[:, None, :] - mean_d[None, :, :]), axis=-1)
        c_dist = jnp.sum(jnp.maximum(margin - diffsum, 0.0) ** 2)
        denom = 2.0 * n_clusters * (n_clusters - 1.0 + 1e-10)
        dist = jnp.where(n_clusters > 0.5,
                         (c_dist + 1e-10) / jnp.where(n_clusters > 0.5, denom, 1.0),
                         0.0)

        # regularization term (absent cluster means are exactly 0).
        reg = jnp.sum(jnp.abs(mean)) / c_safe

        loss = alpha * var + beta * dist + gamma * reg
        out_ref[c:c + 1, 0:1] = jnp.broadcast_to(loss, (1, 1)).astype(f32)
        out_ref[c:c + 1, 1:2] = jnp.broadcast_to(n_fg, (1, 1)).astype(f32)


def discriminative_loss(embeddings, target, *, max_instances,
                        delta_var=0.5, delta_dist=1.5,
                        alpha=1.0, beta=1.0, gamma=0.001):
    """JAX/Pallas equivalent of Discriminative_Loss.forward.

    embeddings: (num, nb_cls, embed_dim) float
    target:     (num, nb_cls, 1) int, -1 = background, 0..max_instances-1 = instance id
    """
    num, nb_cls, embed_dim = embeddings.shape
    labels = target.astype(jnp.int32) + 1                               # 0 = bg, 1.. = instance
    x_cm = jnp.transpose(embeddings.astype(jnp.float32), (1, 0, 2))     # (nb_cls, num, D)
    t_row = jnp.transpose(labels, (1, 2, 0))                            # (nb_cls, 1, num)

    # Static bound on instance ids after the +1 shift.  Raw ids must lie in
    # [-1, max_instances - 1]; ids beyond this bound would be silently dropped from the
    # cluster terms (documented deviation from torch.unique's unbounded behaviour).
    l_pad = max(8, int(max_instances))

    kernel = functools.partial(
        _disc_loss_kernel, l_pad=l_pad, delta_var=delta_var, delta_dist=delta_dist,
        alpha=alpha, beta=beta, gamma=gamma)

    out = pl.pallas_call(
        kernel,
        out_shape=jax.ShapeDtypeStruct((nb_cls, 2), jnp.float32),
        in_specs=[
            pl.BlockSpec(memory_space=pltpu.MemorySpace.VMEM),   # whole embedding slab
            pl.BlockSpec(memory_space=pltpu.MemorySpace.VMEM),   # labels (single copy)
        ],
        out_specs=pl.BlockSpec(memory_space=pltpu.MemorySpace.VMEM),
    )(x_cm, t_row)

    losses = out[:, 0]
    nfg = out[:, 1]
    # PyTorch skips a class if it has <= 2 foreground points, then means the rest.
    # (If no class were valid, PyTorch would error on an empty stack; we return 0.)
    valid = (nfg > 2.0).astype(jnp.float32)
    return jnp.sum(losses * valid) / jnp.maximum(jnp.sum(valid), 1.0)


def _numpy_reference(x, t, delta_var=0.5, delta_dist=1.5, alpha=1.0, beta=1.0, gamma=0.001):
    """Direct float64 transcription of the PyTorch forward, for verification."""
    t = t.astype(np.int64) + 1
    num, nb_cls, _ = t.shape
    losses = []
    for c in range(nb_cls):
        tc = t[:, c, 0]
        fg = np.nonzero(tc)[0]
        if fg.shape[0] <= 2:
            continue
        xi = x[:, c, :][fg].astype(np.float64)
        ti = tc[fg]
        labels, cnts = np.unique(ti, return_counts=True)
        D = xi.shape[1]
        maxl = int(ti.max())
        mean = np.zeros((maxl + 1, D))
        for lbl, cnt in zip(labels, cnts):
            mean[lbl] = xi[ti == lbl].sum(0) / cnt
        sub = np.maximum(np.abs(xi - mean[ti]).sum(1) - delta_var, 0.0) ** 2
        sum_sub = np.zeros(maxl + 1)
        for i in range(len(ti)):
            sum_sub[ti[i]] += sub[i]
        var = (sum_sub[labels] / cnts).sum() / labels.shape[0]
        m = mean[labels]
        C = m.shape[0]
        diff = np.abs(m[:, None, :] - m[None, :, :]).sum(-1)
        margin = 2 * delta_dist * (1.0 - np.eye(C))
        c_dist = np.sum(np.maximum(margin - diff, 0.0) ** 2)
        dist = (c_dist + 1e-10) / (2 * C * (C - 1 + 1e-10))
        reg = np.abs(m).sum() / C
        losses.append(alpha * var + beta * dist + gamma * reg)
    return float(np.mean(losses))


if __name__ == "__main__":
    # Small shapes consistent with the module's forward:
    # input (num, nb_cls, embed_dim), target (num, nb_cls, 1) with -1 background.
    num, nb_cls, embed_dim = 64, 4, 32
    max_instances = 4  # raw instance ids in [-1, max_instances-1]

    key = jax.random.PRNGKey(0)
    kx, kt = jax.random.split(key)
    x = jax.random.normal(kx, (num, nb_cls, embed_dim), dtype=jnp.float32)
    target = jax.random.randint(kt, (num, nb_cls, 1), -1, max_instances, dtype=jnp.int32)

    loss = discriminative_loss(x, target, max_instances=max_instances)
    loss = jax.block_until_ready(loss)

    ref = _numpy_reference(np.asarray(x), np.asarray(target))
    # Tolerance allows for the approximate (EUP) reciprocal of the cluster counts.
    np.testing.assert_allclose(float(loss), ref, rtol=1e-2, atol=1e-3)

    print("KERNEL_OK")
</pallas_src>

<mosaic_0001>
module attributes {stable_mosaic.version = 11 : i64} {
  func.func @_disc_loss_kernel(%arg0: memref<4x64x32xf32, #tpu.memory_space<vmem>>, %arg1: memref<4x1x64xi32, #tpu.memory_space<vmem>>, %arg2: memref<4x2xf32, #tpu.memory_space<vmem>>) attributes {dimension_semantics = [], scalar_prefetch = 0 : i64, scratch_operands = 0 : i64, tpu.core_type = #tpu.core_type<tc>} {
    %0 = tpu.iota {dimensions = array<i32: 0>} : vector<8x64xi32>
    %c1_i32 = arith.constant 1 : i32
    %1 = vector.broadcast %c1_i32 : i32 to vector<8x64xi32>
    %2 = arith.addi %0, %1 : vector<8x64xi32>
    %3 = tpu.iota {dimensions = array<i32: 0>} : vector<8x8xi32>
    %4 = tpu.iota {dimensions = array<i32: 1>} : vector<8x8xi32>
    %5 = arith.cmpi ne, %3, %4 : vector<8x8xi32>
    %6 = arith.extui %5 : vector<8x8xi1> to vector<8x8xi32>
    %7 = arith.sitofp %6 : vector<8x8xi32> to vector<8x8xf32>
    %cst = arith.constant 3.000000e+00 : f32
    %8 = vector.broadcast %cst : f32 to vector<8x8xf32>
    %9 = arith.mulf %8, %7 : vector<8x8xf32>
    %10 = tpu.iota {dimensions = array<i32: 0>} : vector<8x1xi32>
    %11 = arith.sitofp %10 : vector<8x1xi32> to vector<8x1xf32>
    %cst_0 = arith.constant 1.000000e+00 : f32
    %12 = vector.broadcast %cst_0 : f32 to vector<8x1xf32>
    %13 = arith.addf %11, %12 : vector<8x1xf32>
    %cst_1 = arith.constant 0x49742430 : f32
    %14 = vector.broadcast %cst_1 : f32 to vector<8x1xf32>
    %15 = arith.mulf %13, %14 : vector<8x1xf32>
    %c0 = arith.constant 0 : index
    %c0_2 = arith.constant 0 : index
    %c0_3 = arith.constant 0 : index
    %16 = vector.load %arg0[%c0, %c0_2, %c0_3] : memref<4x64x32xf32, #tpu.memory_space<vmem>>, vector<1x64x32xf32>
    %17 = vector.shape_cast %16 : vector<1x64x32xf32> to vector<64x32xf32>
    %c0_4 = arith.constant 0 : index
    %c0_5 = arith.constant 0 : index
    %c0_6 = arith.constant 0 : index
    %18 = vector.load %arg1[%c0_4, %c0_5, %c0_6] : memref<4x1x64xi32, #tpu.memory_space<vmem>>, vector<1x1x64xi32>
    %19 = vector.shape_cast %18 : vector<1x1x64xi32> to vector<1x64xi32>
    %20 = vector.broadcast %19 : vector<1x64xi32> to vector<8x64xi32>
    %21 = arith.cmpi eq, %2, %20 : vector<8x64xi32>
    %22 = arith.extui %21 : vector<8x64xi1> to vector<8x64xi32>
    %23 = arith.sitofp %22 : vector<8x64xi32> to vector<8x64xf32>
    %c0_i32 = arith.constant 0 : i32
    %24 = vector.broadcast %c0_i32 : i32 to vector<1x64xi32>
    %25 = arith.cmpi sgt, %19, %24 : vector<1x64xi32>
    %26 = arith.extui %25 : vector<1x64xi1> to vector<1x64xi32>
    %27 = arith.sitofp %26 : vector<1x64xi32> to vector<1x64xf32>
    %28 = vector.shape_cast %27 : vector<1x64xf32> to vector<1x1x64xf32>
    %cst_7 = arith.constant dense<0.000000e+00> : vector<1xf32>
    %29 = vector.multi_reduction <add>, %28, %cst_7 [1, 2] : vector<1x1x64xf32> to vector<1xf32>
    %30 = vector.shape_cast %29 : vector<1xf32> to vector<1x1x1xf32>
    %31 = vector.extract %30[0, 0, 0] : f32 from vector<1x1x1xf32>
    %cst_8 = arith.constant dense<0.000000e+00> : vector<8xf32>
    %32 = vector.multi_reduction <add>, %23, %cst_8 [1] : vector<8x64xf32> to vector<8xf32>
    %33 = vector.shape_cast %32 : vector<8xf32> to vector<8x1xf32>
    %cst_9 = arith.constant 0.000000e+00 : f32
    %34 = vector.broadcast %cst_9 : f32 to vector<8x1xf32>
    %35 = arith.cmpf ogt, %33, %34 : vector<8x1xf32>
    %36 = arith.extui %35 : vector<8x1xi1> to vector<8x1xi32>
    %37 = arith.sitofp %36 : vector<8x1xi32> to vector<8x1xf32>
    %cst_10 = arith.constant 1.000000e+00 : f32
    %38 = vector.broadcast %cst_10 : f32 to vector<8x1xf32>
    %39 = arith.maximumf %33, %38 : vector<8x1xf32>
    %40 = tpu.reciprocal %39 {approx = true} : vector<8x1xf32> -> vector<8x1xf32>
    %cst_11 = arith.constant dense<0.000000e+00> : vector<8x32xf32>
    %41 = tpu.matmul %23, %17, %cst_11 {dimension_numbers = #tpu.dot_dimension_numbers<[1], [0], [0], [1], [0, 0, 1, 1], [], []>} : vector<8x64xf32>, vector<64x32xf32>, vector<8x32xf32> -> vector<8x32xf32>
    %42 = vector.broadcast %40 : vector<8x1xf32> to vector<8x32xf32>
    %43 = arith.mulf %41, %42 : vector<8x32xf32>
    %cst_12 = arith.constant dense<0.000000e+00> : vector<64x32xf32>
    %44 = tpu.matmul %23, %43, %cst_12 {dimension_numbers = #tpu.dot_dimension_numbers<[0], [0], [1], [1], [0, 1, 1, 1], [], []>} : vector<8x64xf32>, vector<8x32xf32>, vector<64x32xf32> -> vector<64x32xf32>
    %45 = arith.subf %17, %44 : vector<64x32xf32>
    %46 = math.absf %45 : vector<64x32xf32>
    %cst_13 = arith.constant dense<0.000000e+00> : vector<64xf32>
    %47 = vector.multi_reduction <add>, %46, %cst_13 [1] : vector<64x32xf32> to vector<64xf32>
    %48 = vector.shape_cast %47 : vector<64xf32> to vector<64x1xf32>
    %cst_14 = arith.constant 5.000000e-01 : f32
    %49 = vector.broadcast %cst_14 : f32 to vector<64x1xf32>
    %50 = arith.subf %48, %49 : vector<64x1xf32>
    %cst_15 = arith.constant 0.000000e+00 : f32
    %51 = vector.broadcast %cst_15 : f32 to vector<64x1xf32>
    %52 = arith.maximumf %50, %51 : vector<64x1xf32>
    %53 = arith.mulf %52, %52 : vector<64x1xf32>
    %cst_16 = arith.constant dense<0.000000e+00> : vector<8x1xf32>
    %54 = tpu.matmul %23, %53, %cst_16 {dimension_numbers = #tpu.dot_dimension_numbers<[1], [0], [0], [1], [0, 0, 1, 1], [], []>} : vector<8x64xf32>, vector<64x1xf32>, vector<8x1xf32> -> vector<8x1xf32>
    %55 = vector.shape_cast %37 : vector<8x1xf32> to vector<1x8x1xf32>
    %cst_17 = arith.constant dense<0.000000e+00> : vector<1xf32>
    %56 = vector.multi_reduction <add>, %55, %cst_17 [1, 2] : vector<1x8x1xf32> to vector<1xf32>
    %57 = vector.shape_cast %56 : vector<1xf32> to vector<1x1x1xf32>
    %58 = vector.extract %57[0, 0, 0] : f32 from vector<1x1x1xf32>
    %cst_18 = arith.constant 1.000000e+00 : f32
    %59 = arith.maximumf %58, %cst_18 : f32
    %60 = arith.mulf %54, %40 : vector<8x1xf32>
    %61 = vector.shape_cast %60 : vector<8x1xf32> to vector<1x8x1xf32>
    %cst_19 = arith.constant dense<0.000000e+00> : vector<1xf32>
    %62 = vector.multi_reduction <add>, %61, %cst_19 [1, 2] : vector<1x8x1xf32> to vector<1xf32>
    %63 = vector.shape_cast %62 : vector<1xf32> to vector<1x1x1xf32>
    %64 = vector.extract %63[0, 0, 0] : f32 from vector<1x1x1xf32>
    %65 = arith.divf %64, %59 : f32
    %cst_20 = arith.constant 1.000000e+00 : f32
    %66 = vector.broadcast %cst_20 : f32 to vector<8x1xf32>
    %67 = arith.subf %66, %37 : vector<8x1xf32>
    %68 = arith.mulf %67, %15 : vector<8x1xf32>
    %69 = vector.broadcast %68 : vector<8x1xf32> to vector<8x32xf32>
    %70 = arith.addf %43, %69 : vector<8x32xf32>
    %71 = vector.shape_cast %70 : vector<8x32xf32> to vector<8x1x32xf32>
    %72 = vector.shape_cast %70 : vector<8x32xf32> to vector<1x8x32xf32>
    %73 = vector.broadcast %71 : vector<8x1x32xf32> to vector<8x8x32xf32>
    %74 = vector.broadcast %72 : vector<1x8x32xf32> to vector<8x8x32xf32>
    %75 = arith.subf %73, %74 : vector<8x8x32xf32>
    %76 = math.absf %75 : vector<8x8x32xf32>
    %cst_21 = arith.constant dense<0.000000e+00> : vector<8x8xf32>
    %77 = vector.multi_reduction <add>, %76, %cst_21 [2] : vector<8x8x32xf32> to vector<8x8xf32>
    %78 = arith.subf %9, %77 : vector<8x8xf32>
    %cst_22 = arith.constant 0.000000e+00 : f32
    %79 = vector.broadcast %cst_22 : f32 to vector<8x8xf32>
    %80 = arith.maximumf %78, %79 : vector<8x8xf32>
    %81 = arith.mulf %80, %80 : vector<8x8xf32>
    %82 = vector.shape_cast %81 : vector<8x8xf32> to vector<1x8x8xf32>
    %cst_23 = arith.constant dense<0.000000e+00> : vector<1xf32>
    %83 = vector.multi_reduction <add>, %82, %cst_23 [1, 2] : vector<1x8x8xf32> to vector<1xf32>
    %84 = vector.shape_cast %83 : vector<1xf32> to vector<1x1x1xf32>
    %85 = vector.extract %84[0, 0, 0] : f32 from vector<1x1x1xf32>
    %cst_24 = arith.constant 2.000000e+00 : f32
    %86 = arith.mulf %cst_24, %58 : f32
    %cst_25 = arith.constant 1.000000e+00 : f32
    %87 = arith.subf %58, %cst_25 : f32
    %cst_26 = arith.constant 1.000000e-10 : f32
    %88 = arith.addf %87, %cst_26 : f32
    %89 = arith.mulf %86, %88 : f32
    %cst_27 = arith.constant 5.000000e-01 : f32
    %90 = arith.cmpf ogt, %58, %cst_27 : f32
    %cst_28 = arith.constant 1.000000e-10 : f32
    %91 = arith.addf %85, %cst_28 : f32
    %cst_29 = arith.constant 5.000000e-01 : f32
    %92 = arith.cmpf ogt, %58, %cst_29 : f32
    %cst_30 = arith.constant 1.000000e+00 : f32
    %93 = arith.select %92, %89, %cst_30 : f32
    %94 = arith.divf %91, %93 : f32
    %cst_31 = arith.constant 0.000000e+00 : f32
    %95 = arith.select %90, %94, %cst_31 : f32
    %96 = math.absf %43 : vector<8x32xf32>
    %97 = vector.shape_cast %96 : vector<8x32xf32> to vector<1x8x32xf32>
    %cst_32 = arith.constant dense<0.000000e+00> : vector<1xf32>
    %98 = vector.multi_reduction <add>, %97, %cst_32 [1, 2] : vector<1x8x32xf32> to vector<1xf32>
    %99 = vector.shape_cast %98 : vector<1xf32> to vector<1x1x1xf32>
    %100 = vector.extract %99[0, 0, 0] : f32 from vector<1x1x1xf32>
    %101 = arith.divf %100, %59 : f32
    %cst_33 = arith.constant 1.000000e+00 : f32
    %102 = arith.mulf %cst_33, %65 : f32
    %cst_34 = arith.constant 1.000000e+00 : f32
    %103 = arith.mulf %cst_34, %95 : f32
    %104 = arith.addf %102, %103 : f32
    %cst_35 = arith.constant 1.000000e-03 : f32
    %105 = arith.mulf %cst_35, %101 : f32
    %106 = arith.addf %104, %105 : f32
    %107 = vector.broadcast %106 : f32 to vector<1x1xf32>
    %c0_36 = arith.constant 0 : index
    %c0_37 = arith.constant 0 : index
    %108 = vector.load %arg2[%c0_36, %c0_37] : memref<4x2xf32, #tpu.memory_space<vmem>>, vector<1x1xf32>
    tpu.vector_store %arg2[%c0_36, %c0_37], %107 {strides = array<i32>} : memref<4x2xf32, #tpu.memory_space<vmem>>, vector<1x1xf32>,
    %109 = vector.broadcast %31 : f32 to vector<1x1xf32>
    %c0_38 = arith.constant 0 : index
    %c1 = arith.constant 1 : index
    %110 = vector.load %arg2[%c0_38, %c1] : memref<4x2xf32, #tpu.memory_space<vmem>>, vector<1x1xf32>
    tpu.vector_store %arg2[%c0_38, %c1], %109 {strides = array<i32>} : memref<4x2xf32, #tpu.memory_space<vmem>>, vector<1x1xf32>,
    %c1_39 = arith.constant 1 : index
    %c0_40 = arith.constant 0 : index
    %c0_41 = arith.constant 0 : index
    %111 = vector.load %arg0[%c1_39, %c0_40, %c0_41] : memref<4x64x32xf32, #tpu.memory_space<vmem>>, vector<1x64x32xf32>
    %112 = vector.shape_cast %111 : vector<1x64x32xf32> to vector<64x32xf32>
    %c1_42 = arith.constant 1 : index
    %c0_43 = arith.constant 0 : index
    %c0_44 = arith.constant 0 : index
    %113 = vector.load %arg1[%c1_42, %c0_43, %c0_44] : memref<4x1x64xi32, #tpu.memory_space<vmem>>, vector<1x1x64xi32>
    %114 = vector.shape_cast %113 : vector<1x1x64xi32> to vector<1x64xi32>
    %115 = vector.broadcast %114 : vector<1x64xi32> to vector<8x64xi32>
    %116 = arith.cmpi eq, %2, %115 : vector<8x64xi32>
    %117 = arith.extui %116 : vector<8x64xi1> to vector<8x64xi32>
    %118 = arith.sitofp %117 : vector<8x64xi32> to vector<8x64xf32>
    %c0_i32_45 = arith.constant 0 : i32
    %119 = vector.broadcast %c0_i32_45 : i32 to vector<1x64xi32>
    %120 = arith.cmpi sgt, %114, %119 : vector<1x64xi32>
    %121 = arith.extui %120 : vector<1x64xi1> to vector<1x64xi32>
    %122 = arith.sitofp %121 : vector<1x64xi32> to vector<1x64xf32>
    %123 = vector.shape_cast %122 : vector<1x64xf32> to vector<1x1x64xf32>
    %cst_46 = arith.constant dense<0.000000e+00> : vector<1xf32>
    %124 = vector.multi_reduction <add>, %123, %cst_46 [1, 2] : vector<1x1x64xf32> to vector<1xf32>
    %125 = vector.shape_cast %124 : vector<1xf32> to vector<1x1x1xf32>
    %126 = vector.extract %125[0, 0, 0] : f32 from vector<1x1x1xf32>
    %cst_47 = arith.constant dense<0.000000e+00> : vector<8xf32>
    %127 = vector.multi_reduction <add>, %118, %cst_47 [1] : vector<8x64xf32> to vector<8xf32>
    %128 = vector.shape_cast %127 : vector<8xf32> to vector<8x1xf32>
    %cst_48 = arith.constant 0.000000e+00 : f32
    %129 = vector.broadcast %cst_48 : f32 to vector<8x1xf32>
    %130 = arith.cmpf ogt, %128, %129 : vector<8x1xf32>
    %131 = arith.extui %130 : vector<8x1xi1> to vector<8x1xi32>
    %132 = arith.sitofp %131 : vector<8x1xi32> to vector<8x1xf32>
    %cst_49 = arith.constant 1.000000e+00 : f32
    %133 = vector.broadcast %cst_49 : f32 to vector<8x1xf32>
    %134 = arith.maximumf %128, %133 : vector<8x1xf32>
    %135 = tpu.reciprocal %134 {approx = true} : vector<8x1xf32> -> vector<8x1xf32>
    %cst_50 = arith.constant dense<0.000000e+00> : vector<8x32xf32>
    %136 = tpu.matmul %118, %112, %cst_50 {dimension_numbers = #tpu.dot_dimension_numbers<[1], [0], [0], [1], [0, 0, 1, 1], [], []>} : vector<8x64xf32>, vector<64x32xf32>, vector<8x32xf32> -> vector<8x32xf32>
    %137 = vector.broadcast %135 : vector<8x1xf32> to vector<8x32xf32>
    %138 = arith.mulf %136, %137 : vector<8x32xf32>
    %cst_51 = arith.constant dense<0.000000e+00> : vector<64x32xf32>
    %139 = tpu.matmul %118, %138, %cst_51 {dimension_numbers = #tpu.dot_dimension_numbers<[0], [0], [1], [1], [0, 1, 1, 1], [], []>} : vector<8x64xf32>, vector<8x32xf32>, vector<64x32xf32> -> vector<64x32xf32>
    %140 = arith.subf %112, %139 : vector<64x32xf32>
    %141 = math.absf %140 : vector<64x32xf32>
    %cst_52 = arith.constant dense<0.000000e+00> : vector<64xf32>
    %142 = vector.multi_reduction <add>, %141, %cst_52 [1] : vector<64x32xf32> to vector<64xf32>
    %143 = vector.shape_cast %142 : vector<64xf32> to vector<64x1xf32>
    %cst_53 = arith.constant 5.000000e-01 : f32
    %144 = vector.broadcast %cst_53 : f32 to vector<64x1xf32>
    %145 = arith.subf %143, %144 : vector<64x1xf32>
    %cst_54 = arith.constant 0.000000e+00 : f32
    %146 = vector.broadcast %cst_54 : f32 to vector<64x1xf32>
    %147 = arith.maximumf %145, %146 : vector<64x1xf32>
    %148 = arith.mulf %147, %147 : vector<64x1xf32>
    %cst_55 = arith.constant dense<0.000000e+00> : vector<8x1xf32>
    %149 = tpu.matmul %118, %148, %cst_55 {dimension_numbers = #tpu.dot_dimension_numbers<[1], [0], [0], [1], [0, 0, 1, 1], [], []>} : vector<8x64xf32>, vector<64x1xf32>, vector<8x1xf32> -> vector<8x1xf32>
    %150 = vector.shape_cast %132 : vector<8x1xf32> to vector<1x8x1xf32>
    %cst_56 = arith.constant dense<0.000000e+00> : vector<1xf32>
    %151 = vector.multi_reduction <add>, %150, %cst_56 [1, 2] : vector<1x8x1xf32> to vector<1xf32>
    %152 = vector.shape_cast %151 : vector<1xf32> to vector<1x1x1xf32>
    %153 = vector.extract %152[0, 0, 0] : f32 from vector<1x1x1xf32>
    %cst_57 = arith.constant 1.000000e+00 : f32
    %154 = arith.maximumf %153, %cst_57 : f32
    %155 = arith.mulf %149, %135 : vector<8x1xf32>
    %156 = vector.shape_cast %155 : vector<8x1xf32> to vector<1x8x1xf32>
    %cst_58 = arith.constant dense<0.000000e+00> : vector<1xf32>
    %157 = vector.multi_reduction <add>, %156, %cst_58 [1, 2] : vector<1x8x1xf32> to vector<1xf32>
    %158 = vector.shape_cast %157 : vector<1xf32> to vector<1x1x1xf32>
    %159 = vector.extract %158[0, 0, 0] : f32 from vector<1x1x1xf32>
    %160 = arith.divf %159, %154 : f32
    %cst_59 = arith.constant 1.000000e+00 : f32
    %161 = vector.broadcast %cst_59 : f32 to vector<8x1xf32>
    %162 = arith.subf %161, %132 : vector<8x1xf32>
    %163 = arith.mulf %162, %15 : vector<8x1xf32>
    %164 = vector.broadcast %163 : vector<8x1xf32> to vector<8x32xf32>
    %165 = arith.addf %138, %164 : vector<8x32xf32>
    %166 = vector.shape_cast %165 : vector<8x32xf32> to vector<8x1x32xf32>
    %167 = vector.shape_cast %165 : vector<8x32xf32> to vector<1x8x32xf32>
    %168 = vector.broadcast %166 : vector<8x1x32xf32> to vector<8x8x32xf32>
    %169 = vector.broadcast %167 : vector<1x8x32xf32> to vector<8x8x32xf32>
    %170 = arith.subf %168, %169 : vector<8x8x32xf32>
    %171 = math.absf %170 : vector<8x8x32xf32>
    %cst_60 = arith.constant dense<0.000000e+00> : vector<8x8xf32>
    %172 = vector.multi_reduction <add>, %171, %cst_60 [2] : vector<8x8x32xf32> to vector<8x8xf32>
    %173 = arith.subf %9, %172 : vector<8x8xf32>
    %cst_61 = arith.constant 0.000000e+00 : f32
    %174 = vector.broadcast %cst_61 : f32 to vector<8x8xf32>
    %175 = arith.maximumf %173, %174 : vector<8x8xf32>
    %176 = arith.mulf %175, %175 : vector<8x8xf32>
    %177 = vector.shape_cast %176 : vector<8x8xf32> to vector<1x8x8xf32>
    %cst_62 = arith.constant dense<0.000000e+00> : vector<1xf32>
    %178 = vector.multi_reduction <add>, %177, %cst_62 [1, 2] : vector<1x8x8xf32> to vector<1xf32>
    %179 = vector.shape_cast %178 : vector<1xf32> to vector<1x1x1xf32>
    %180 = vector.extract %179[0, 0, 0] : f32 from vector<1x1x1xf32>
    %cst_63 = arith.constant 2.000000e+00 : f32
    %181 = arith.mulf %cst_63, %153 : f32
    %cst_64 = arith.constant 1.000000e+00 : f32
    %182 = arith.subf %153, %cst_64 : f32
    %cst_65 = arith.constant 1.000000e-10 : f32
    %183 = arith.addf %182, %cst_65 : f32
    %184 = arith.mulf %181, %183 : f32
    %cst_66 = arith.constant 5.000000e-01 : f32
    %185 = arith.cmpf ogt, %153, %cst_66 : f32
    %cst_67 = arith.constant 1.000000e-10 : f32
    %186 = arith.addf %180, %cst_67 : f32
    %cst_68 = arith.constant 5.000000e-01 : f32
    %187 = arith.cmpf ogt, %153, %cst_68 : f32
    %cst_69 = arith.constant 1.000000e+00 : f32
    %188 = arith.select %187, %184, %cst_69 : f32
    %189 = arith.divf %186, %188 : f32
    %cst_70 = arith.constant 0.000000e+00 : f32
    %190 = arith.select %185, %189, %cst_70 : f32
    %191 = math.absf %138 : vector<8x32xf32>
    %192 = vector.shape_cast %191 : vector<8x32xf32> to vector<1x8x32xf32>
    %cst_71 = arith.constant dense<0.000000e+00> : vector<1xf32>
    %193 = vector.multi_reduction <add>, %192, %cst_71 [1, 2] : vector<1x8x32xf32> to vector<1xf32>
    %194 = vector.shape_cast %193 : vector<1xf32> to vector<1x1x1xf32>
    %195 = vector.extract %194[0, 0, 0] : f32 from vector<1x1x1xf32>
    %196 = arith.divf %195, %154 : f32
    %cst_72 = arith.constant 1.000000e+00 : f32
    %197 = arith.mulf %cst_72, %160 : f32
    %cst_73 = arith.constant 1.000000e+00 : f32
    %198 = arith.mulf %cst_73, %190 : f32
    %199 = arith.addf %197, %198 : f32
    %cst_74 = arith.constant 1.000000e-03 : f32
    %200 = arith.mulf %cst_74, %196 : f32
    %201 = arith.addf %199, %200 : f32
    %202 = vector.broadcast %201 : f32 to vector<1x1xf32>
    %c1_75 = arith.constant 1 : index
    %c0_76 = arith.constant 0 : index
    %203 = vector.load %arg2[%c1_75, %c0_76] : memref<4x2xf32, #tpu.memory_space<vmem>>, vector<1x1xf32>
    tpu.vector_store %arg2[%c1_75, %c0_76], %202 {strides = array<i32>} : memref<4x2xf32, #tpu.memory_space<vmem>>, vector<1x1xf32>,
    %204 = vector.broadcast %126 : f32 to vector<1x1xf32>
    %c1_77 = arith.constant 1 : index
    %c1_78 = arith.constant 1 : index
    %205 = vector.load %arg2[%c1_77, %c1_78] : memref<4x2xf32, #tpu.memory_space<vmem>>, vector<1x1xf32>
    tpu.vector_store %arg2[%c1_77, %c1_78], %204 {strides = array<i32>} : memref<4x2xf32, #tpu.memory_space<vmem>>, vector<1x1xf32>,
    %c2 = arith.constant 2 : index
    %c0_79 = arith.constant 0 : index
    %c0_80 = arith.constant 0 : index
    %206 = vector.load %arg0[%c2, %c0_79, %c0_80] : memref<4x64x32xf32, #tpu.memory_space<vmem>>, vector<1x64x32xf32>
    %207 = vector.shape_cast %206 : vector<1x64x32xf32> to vector<64x32xf32>
    %c2_81 = arith.constant 2 : index
    %c0_82 = arith.constant 0 : index
    %c0_83 = arith.constant 0 : index
    %208 = vector.load %arg1[%c2_81, %c0_82, %c0_83] : memref<4x1x64xi32, #tpu.memory_space<vmem>>, vector<1x1x64xi32>
    %209 = vector.shape_cast %208 : vector<1x1x64xi32> to vector<1x64xi32>
    %210 = vector.broadcast %209 : vector<1x64xi32> to vector<8x64xi32>
    %211 = arith.cmpi eq, %2, %210 : vector<8x64xi32>
    %212 = arith.extui %211 : vector<8x64xi1> to vector<8x64xi32>
    %213 = arith.sitofp %212 : vector<8x64xi32> to vector<8x64xf32>
    %c0_i32_84 = arith.constant 0 : i32
    %214 = vector.broadcast %c0_i32_84 : i32 to vector<1x64xi32>
    %215 = arith.cmpi sgt, %209, %214 : vector<1x64xi32>
    %216 = arith.extui %215 : vector<1x64xi1> to vector<1x64xi32>
    %217 = arith.sitofp %216 : vector<1x64xi32> to vector<1x64xf32>
    %218 = vector.shape_cast %217 : vector<1x64xf32> to vector<1x1x64xf32>
    %cst_85 = arith.constant dense<0.000000e+00> : vector<1xf32>
    %219 = vector.multi_reduction <add>, %218, %cst_85 [1, 2] : vector<1x1x64xf32> to vector<1xf32>
    %220 = vector.shape_cast %219 : vector<1xf32> to vector<1x1x1xf32>
    %221 = vector.extract %220[0, 0, 0] : f32 from vector<1x1x1xf32>
    %cst_86 = arith.constant dense<0.000000e+00> : vector<8xf32>
    %222 = vector.multi_reduction <add>, %213, %cst_86 [1] : vector<8x64xf32> to vector<8xf32>
    %223 = vector.shape_cast %222 : vector<8xf32> to vector<8x1xf32>
    %cst_87 = arith.constant 0.000000e+00 : f32
    %224 = vector.broadcast %cst_87 : f32 to vector<8x1xf32>
    %225 = arith.cmpf ogt, %223, %224 : vector<8x1xf32>
    %226 = arith.extui %225 : vector<8x1xi1> to vector<8x1xi32>
    %227 = arith.sitofp %226 : vector<8x1xi32> to vector<8x1xf32>
    %cst_88 = arith.constant 1.000000e+00 : f32
    %228 = vector.broadcast %cst_88 : f32 to vector<8x1xf32>
    %229 = arith.maximumf %223, %228 : vector<8x1xf32>
    %230 = tpu.reciprocal %229 {approx = true} : vector<8x1xf32> -> vector<8x1xf32>
    %cst_89 = arith.constant dense<0.000000e+00> : vector<8x32xf32>
    %231 = tpu.matmul %213, %207, %cst_89 {dimension_numbers = #tpu.dot_dimension_numbers<[1], [0], [0], [1], [0, 0, 1, 1], [], []>} : vector<8x64xf32>, vector<64x32xf32>, vector<8x32xf32> -> vector<8x32xf32>
    %232 = vector.broadcast %230 : vector<8x1xf32> to vector<8x32xf32>
    %233 = arith.mulf %231, %232 : vector<8x32xf32>
    %cst_90 = arith.constant dense<0.000000e+00> : vector<64x32xf32>
    %234 = tpu.matmul %213, %233, %cst_90 {dimension_numbers = #tpu.dot_dimension_numbers<[0], [0], [1], [1], [0, 1, 1, 1], [], []>} : vector<8x64xf32>, vector<8x32xf32>, vector<64x32xf32> -> vector<64x32xf32>
    %235 = arith.subf %207, %234 : vector<64x32xf32>
    %236 = math.absf %235 : vector<64x32xf32>
    %cst_91 = arith.constant dense<0.000000e+00> : vector<64xf32>
    %237 = vector.multi_reduction <add>, %236, %cst_91 [1] : vector<64x32xf32> to vector<64xf32>
    %238 = vector.shape_cast %237 : vector<64xf32> to vector<64x1xf32>
    %cst_92 = arith.constant 5.000000e-01 : f32
    %239 = vector.broadcast %cst_92 : f32 to vector<64x1xf32>
    %240 = arith.subf %238, %239 : vector<64x1xf32>
    %cst_93 = arith.constant 0.000000e+00 : f32
    %241 = vector.broadcast %cst_93 : f32 to vector<64x1xf32>
    %242 = arith.maximumf %240, %241 : vector<64x1xf32>
    %243 = arith.mulf %242, %242 : vector<64x1xf32>
    %cst_94 = arith.constant dense<0.000000e+00> : vector<8x1xf32>
    %244 = tpu.matmul %213, %243, %cst_94 {dimension_numbers = #tpu.dot_dimension_numbers<[1], [0], [0], [1], [0, 0, 1, 1], [], []>} : vector<8x64xf32>, vector<64x1xf32>, vector<8x1xf32> -> vector<8x1xf32>
    %245 = vector.shape_cast %227 : vector<8x1xf32> to vector<1x8x1xf32>
    %cst_95 = arith.constant dense<0.000000e+00> : vector<1xf32>
    %246 = vector.multi_reduction <add>, %245, %cst_95 [1, 2] : vector<1x8x1xf32> to vector<1xf32>
    %247 = vector.shape_cast %246 : vector<1xf32> to vector<1x1x1xf32>
    %248 = vector.extract %247[0, 0, 0] : f32 from vector<1x1x1xf32>
    %cst_96 = arith.constant 1.000000e+00 : f32
    %249 = arith.maximumf %248, %cst_96 : f32
    %250 = arith.mulf %244, %230 : vector<8x1xf32>
    %251 = vector.shape_cast %250 : vector<8x1xf32> to vector<1x8x1xf32>
    %cst_97 = arith.constant dense<0.000000e+00> : vector<1xf32>
    %252 = vector.multi_reduction <add>, %251, %cst_97 [1, 2] : vector<1x8x1xf32> to vector<1xf32>
    %253 = vector.shape_cast %252 : vector<1xf32> to vector<1x1x1xf32>
    %254 = vector.extract %253[0, 0, 0] : f32 from vector<1x1x1xf32>
    %255 = arith.divf %254, %249 : f32
    %cst_98 = arith.constant 1.000000e+00 : f32
    %256 = vector.broadcast %cst_98 : f32 to vector<8x1xf32>
    %257 = arith.subf %256, %227 : vector<8x1xf32>
    %258 = arith.mulf %257, %15 : vector<8x1xf32>
    %259 = vector.broadcast %258 : vector<8x1xf32> to vector<8x32xf32>
    %260 = arith.addf %233, %259 : vector<8x32xf32>
    %261 = vector.shape_cast %260 : vector<8x32xf32> to vector<8x1x32xf32>
    %262 = vector.shape_cast %260 : vector<8x32xf32> to vector<1x8x32xf32>
    %263 = vector.broadcast %261 : vector<8x1x32xf32> to vector<8x8x32xf32>
    %264 = vector.broadcast %262 : vector<1x8x32xf32> to vector<8x8x32xf32>
    %265 = arith.subf %263, %264 : vector<8x8x32xf32>
    %266 = math.absf %265 : vector<8x8x32xf32>
    %cst_99 = arith.constant dense<0.000000e+00> : vector<8x8xf32>
    %267 = vector.multi_reduction <add>, %266, %cst_99 [2] : vector<8x8x32xf32> to vector<8x8xf32>
    %268 = arith.subf %9, %267 : vector<8x8xf32>
    %cst_100 = arith.constant 0.000000e+00 : f32
    %269 = vector.broadcast %cst_100 : f32 to vector<8x8xf32>
    %270 = arith.maximumf %268, %269 : vector<8x8xf32>
    %271 = arith.mulf %270, %270 : vector<8x8xf32>
    %272 = vector.shape_cast %271 : vector<8x8xf32> to vector<1x8x8xf32>
    %cst_101 = arith.constant dense<0.000000e+00> : vector<1xf32>
    %273 = vector.multi_reduction <add>, %272, %cst_101 [1, 2] : vector<1x8x8xf32> to vector<1xf32>
    %274 = vector.shape_cast %273 : vector<1xf32> to vector<1x1x1xf32>
    %275 = vector.extract %274[0, 0, 0] : f32 from vector<1x1x1xf32>
    %cst_102 = arith.constant 2.000000e+00 : f32
    %276 = arith.mulf %cst_102, %248 : f32
    %cst_103 = arith.constant 1.000000e+00 : f32
    %277 = arith.subf %248, %cst_103 : f32
    %cst_104 = arith.constant 1.000000e-10 : f32
    %278 = arith.addf %277, %cst_104 : f32
    %279 = arith.mulf %276, %278 : f32
    %cst_105 = arith.constant 5.000000e-01 : f32
    %280 = arith.cmpf ogt, %248, %cst_105 : f32
    %cst_106 = arith.constant 1.000000e-10 : f32
    %281 = arith.addf %275, %cst_106 : f32
    %cst_107 = arith.constant 5.000000e-01 : f32
    %282 = arith.cmpf ogt, %248, %cst_107 : f32
    %cst_108 = arith.constant 1.000000e+00 : f32
    %283 = arith.select %282, %279, %cst_108 : f32
    %284 = arith.divf %281, %283 : f32
    %cst_109 = arith.constant 0.000000e+00 : f32
    %285 = arith.select %280, %284, %cst_109 : f32
    %286 = math.absf %233 : vector<8x32xf32>
    %287 = vector.shape_cast %286 : vector<8x32xf32> to vector<1x8x32xf32>
    %cst_110 = arith.constant dense<0.000000e+00> : vector<1xf32>
    %288 = vector.multi_reduction <add>, %287, %cst_110 [1, 2] : vector<1x8x32xf32> to vector<1xf32>
    %289 = vector.shape_cast %288 : vector<1xf32> to vector<1x1x1xf32>
    %290 = vector.extract %289[0, 0, 0] : f32 from vector<1x1x1xf32>
    %291 = arith.divf %290, %249 : f32
    %cst_111 = arith.constant 1.000000e+00 : f32
    %292 = arith.mulf %cst_111, %255 : f32
    %cst_112 = arith.constant 1.000000e+00 : f32
    %293 = arith.mulf %cst_112, %285 : f32
    %294 = arith.addf %292, %293 : f32
    %cst_113 = arith.constant 1.000000e-03 : f32
    %295 = arith.mulf %cst_113, %291 : f32
    %296 = arith.addf %294, %295 : f32
    %297 = vector.broadcast %296 : f32 to vector<1x1xf32>
    %c2_114 = arith.constant 2 : index
    %c0_115 = arith.constant 0 : index
    %298 = vector.load %arg2[%c2_114, %c0_115] : memref<4x2xf32, #tpu.memory_space<vmem>>, vector<1x1xf32>
    tpu.vector_store %arg2[%c2_114, %c0_115], %297 {strides = array<i32>} : memref<4x2xf32, #tpu.memory_space<vmem>>, vector<1x1xf32>,
    %299 = vector.broadcast %221 : f32 to vector<1x1xf32>
    %c2_116 = arith.constant 2 : index
    %c1_117 = arith.constant 1 : index
    %300 = vector.load %arg2[%c2_116, %c1_117] : memref<4x2xf32, #tpu.memory_space<vmem>>, vector<1x1xf32>
    tpu.vector_store %arg2[%c2_116, %c1_117], %299 {strides = array<i32>} : memref<4x2xf32, #tpu.memory_space<vmem>>, vector<1x1xf32>,
    %c3 = arith.constant 3 : index
    %c0_118 = arith.constant 0 : index
    %c0_119 = arith.constant 0 : index
    %301 = vector.load %arg0[%c3, %c0_118, %c0_119] : memref<4x64x32xf32, #tpu.memory_space<vmem>>, vector<1x64x32xf32>
    %302 = vector.shape_cast %301 : vector<1x64x32xf32> to vector<64x32xf32>
    %c3_120 = arith.constant 3 : index
    %c0_121 = arith.constant 0 : index
    %c0_122 = arith.constant 0 : index
    %303 = vector.load %arg1[%c3_120, %c0_121, %c0_122] : memref<4x1x64xi32, #tpu.memory_space<vmem>>, vector<1x1x64xi32>
    %304 = vector.shape_cast %303 : vector<1x1x64xi32> to vector<1x64xi32>
    %305 = vector.broadcast %304 : vector<1x64xi32> to vector<8x64xi32>
    %306 = arith.cmpi eq, %2, %305 : vector<8x64xi32>
    %307 = arith.extui %306 : vector<8x64xi1> to vector<8x64xi32>
    %308 = arith.sitofp %307 : vector<8x64xi32> to vector<8x64xf32>
    %c0_i32_123 = arith.constant 0 : i32
    %309 = vector.broadcast %c0_i32_123 : i32 to vector<1x64xi32>
    %310 = arith.cmpi sgt, %304, %309 : vector<1x64xi32>
    %311 = arith.extui %310 : vector<1x64xi1> to vector<1x64xi32>
    %312 = arith.sitofp %311 : vector<1x64xi32> to vector<1x64xf32>
    %313 = vector.shape_cast %312 : vector<1x64xf32> to vector<1x1x64xf32>
    %cst_124 = arith.constant dense<0.000000e+00> : vector<1xf32>
    %314 = vector.multi_reduction <add>, %313, %cst_124 [1, 2] : vector<1x1x64xf32> to vector<1xf32>
    %315 = vector.shape_cast %314 : vector<1xf32> to vector<1x1x1xf32>
    %316 = vector.extract %315[0, 0, 0] : f32 from vector<1x1x1xf32>
    %cst_125 = arith.constant dense<0.000000e+00> : vector<8xf32>
    %317 = vector.multi_reduction <add>, %308, %cst_125 [1] : vector<8x64xf32> to vector<8xf32>
    %318 = vector.shape_cast %317 : vector<8xf32> to vector<8x1xf32>
    %cst_126 = arith.constant 0.000000e+00 : f32
    %319 = vector.broadcast %cst_126 : f32 to vector<8x1xf32>
    %320 = arith.cmpf ogt, %318, %319 : vector<8x1xf32>
    %321 = arith.extui %320 : vector<8x1xi1> to vector<8x1xi32>
    %322 = arith.sitofp %321 : vector<8x1xi32> to vector<8x1xf32>
    %cst_127 = arith.constant 1.000000e+00 : f32
    %323 = vector.broadcast %cst_127 : f32 to vector<8x1xf32>
    %324 = arith.maximumf %318, %323 : vector<8x1xf32>
    %325 = tpu.reciprocal %324 {approx = true} : vector<8x1xf32> -> vector<8x1xf32>
    %cst_128 = arith.constant dense<0.000000e+00> : vector<8x32xf32>
    %326 = tpu.matmul %308, %302, %cst_128 {dimension_numbers = #tpu.dot_dimension_numbers<[1], [0], [0], [1], [0, 0, 1, 1], [], []>} : vector<8x64xf32>, vector<64x32xf32>, vector<8x32xf32> -> vector<8x32xf32>
    %327 = vector.broadcast %325 : vector<8x1xf32> to vector<8x32xf32>
    %328 = arith.mulf %326, %327 : vector<8x32xf32>
    %cst_129 = arith.constant dense<0.000000e+00> : vector<64x32xf32>
    %329 = tpu.matmul %308, %328, %cst_129 {dimension_numbers = #tpu.dot_dimension_numbers<[0], [0], [1], [1], [0, 1, 1, 1], [], []>} : vector<8x64xf32>, vector<8x32xf32>, vector<64x32xf32> -> vector<64x32xf32>
    %330 = arith.subf %302, %329 : vector<64x32xf32>
    %331 = math.absf %330 : vector<64x32xf32>
    %cst_130 = arith.constant dense<0.000000e+00> : vector<64xf32>
    %332 = vector.multi_reduction <add>, %331, %cst_130 [1] : vector<64x32xf32> to vector<64xf32>
    %333 = vector.shape_cast %332 : vector<64xf32> to vector<64x1xf32>
    %cst_131 = arith.constant 5.000000e-01 : f32
    %334 = vector.broadcast %cst_131 : f32 to vector<64x1xf32>
    %335 = arith.subf %333, %334 : vector<64x1xf32>
    %cst_132 = arith.constant 0.000000e+00 : f32
    %336 = vector.broadcast %cst_132 : f32 to vector<64x1xf32>
    %337 = arith.maximumf %335, %336 : vector<64x1xf32>
    %338 = arith.mulf %337, %337 : vector<64x1xf32>
    %cst_133 = arith.constant dense<0.000000e+00> : vector<8x1xf32>
    %339 = tpu.matmul %308, %338, %cst_133 {dimension_numbers = #tpu.dot_dimension_numbers<[1], [0], [0], [1], [0, 0, 1, 1], [], []>} : vector<8x64xf32>, vector<64x1xf32>, vector<8x1xf32> -> vector<8x1xf32>
    %340 = vector.shape_cast %322 : vector<8x1xf32> to vector<1x8x1xf32>
    %cst_134 = arith.constant dense<0.000000e+00> : vector<1xf32>
    %341 = vector.multi_reduction <add>, %340, %cst_134 [1, 2] : vector<1x8x1xf32> to vector<1xf32>
    %342 = vector.shape_cast %341 : vector<1xf32> to vector<1x1x1xf32>
    %343 = vector.extract %342[0, 0, 0] : f32 from vector<1x1x1xf32>
    %cst_135 = arith.constant 1.000000e+00 : f32
    %344 = arith.maximumf %343, %cst_135 : f32
    %345 = arith.mulf %339, %325 : vector<8x1xf32>
    %346 = vector.shape_cast %345 : vector<8x1xf32> to vector<1x8x1xf32>
    %cst_136 = arith.constant dense<0.000000e+00> : vector<1xf32>
    %347 = vector.multi_reduction <add>, %346, %cst_136 [1, 2] : vector<1x8x1xf32> to vector<1xf32>
    %348 = vector.shape_cast %347 : vector<1xf32> to vector<1x1x1xf32>
    %349 = vector.extract %348[0, 0, 0] : f32 from vector<1x1x1xf32>
    %350 = arith.divf %349, %344 : f32
    %cst_137 = arith.constant 1.000000e+00 : f32
    %351 = vector.broadcast %cst_137 : f32 to vector<8x1xf32>
    %352 = arith.subf %351, %322 : vector<8x1xf32>
    %353 = arith.mulf %352, %15 : vector<8x1xf32>
    %354 = vector.broadcast %353 : vector<8x1xf32> to vector<8x32xf32>
    %355 = arith.addf %328, %354 : vector<8x32xf32>
    %356 = vector.shape_cast %355 : vector<8x32xf32> to vector<8x1x32xf32>
    %357 = vector.shape_cast %355 : vector<8x32xf32> to vector<1x8x32xf32>
    %358 = vector.broadcast %356 : vector<8x1x32xf32> to vector<8x8x32xf32>
    %359 = vector.broadcast %357 : vector<1x8x32xf32> to vector<8x8x32xf32>
    %360 = arith.subf %358, %359 : vector<8x8x32xf32>
    %361 = math.absf %360 : vector<8x8x32xf32>
    %cst_138 = arith.constant dense<0.000000e+00> : vector<8x8xf32>
    %362 = vector.multi_reduction <add>, %361, %cst_138 [2] : vector<8x8x32xf32> to vector<8x8xf32>
    %363 = arith.subf %9, %362 : vector<8x8xf32>
    %cst_139 = arith.constant 0.000000e+00 : f32
    %364 = vector.broadcast %cst_139 : f32 to vector<8x8xf32>
    %365 = arith.maximumf %363, %364 : vector<8x8xf32>
    %366 = arith.mulf %365, %365 : vector<8x8xf32>
    %367 = vector.shape_cast %366 : vector<8x8xf32> to vector<1x8x8xf32>
    %cst_140 = arith.constant dense<0.000000e+00> : vector<1xf32>
    %368 = vector.multi_reduction <add>, %367, %cst_140 [1, 2] : vector<1x8x8xf32> to vector<1xf32>
    %369 = vector.shape_cast %368 : vector<1xf32> to vector<1x1x1xf32>
    %370 = vector.extract %369[0, 0, 0] : f32 from vector<1x1x1xf32>
    %cst_141 = arith.constant 2.000000e+00 : f32
    %371 = arith.mulf %cst_141, %343 : f32
    %cst_142 = arith.constant 1.000000e+00 : f32
    %372 = arith.subf %343, %cst_142 : f32
    %cst_143 = arith.constant 1.000000e-10 : f32
    %373 = arith.addf %372, %cst_143 : f32
    %374 = arith.mulf %371, %373 : f32
    %cst_144 = arith.constant 5.000000e-01 : f32
    %375 = arith.cmpf ogt, %343, %cst_144 : f32
    %cst_145 = arith.constant 1.000000e-10 : f32
    %376 = arith.addf %370, %cst_145 : f32
    %cst_146 = arith.constant 5.000000e-01 : f32
    %377 = arith.cmpf ogt, %343, %cst_146 : f32
    %cst_147 = arith.constant 1.000000e+00 : f32
    %378 = arith.select %377, %374, %cst_147 : f32
    %379 = arith.divf %376, %378 : f32
    %cst_148 = arith.constant 0.000000e+00 : f32
    %380 = arith.select %375, %379, %cst_148 : f32
    %381 = math.absf %328 : vector<8x32xf32>
    %382 = vector.shape_cast %381 : vector<8x32xf32> to vector<1x8x32xf32>
    %cst_149 = arith.constant dense<0.000000e+00> : vector<1xf32>
    %383 = vector.multi_reduction <add>, %382, %cst_149 [1, 2] : vector<1x8x32xf32> to vector<1xf32>
    %384 = vector.shape_cast %383 : vector<1xf32> to vector<1x1x1xf32>
    %385 = vector.extract %384[0, 0, 0] : f32 from vector<1x1x1xf32>
    %386 = arith.divf %385, %344 : f32
    %cst_150 = arith.constant 1.000000e+00 : f32
    %387 = arith.mulf %cst_150, %350 : f32
    %cst_151 = arith.constant 1.000000e+00 : f32
    %388 = arith.mulf %cst_151, %380 : f32
    %389 = arith.addf %387, %388 : f32
    %cst_152 = arith.constant 1.000000e-03 : f32
    %390 = arith.mulf %cst_152, %386 : f32
    %391 = arith.addf %389, %390 : f32
    %392 = vector.broadcast %391 : f32 to vector<1x1xf32>
    %c3_153 = arith.constant 3 : index
    %c0_154 = arith.constant 0 : index
    %393 = vector.load %arg2[%c3_153, %c0_154] : memref<4x2xf32, #tpu.memory_space<vmem>>, vector<1x1xf32>
    tpu.vector_store %arg2[%c3_153, %c0_154], %392 {strides = array<i32>} : memref<4x2xf32, #tpu.memory_space<vmem>>, vector<1x1xf32>,
    %394 = vector.broadcast %316 : f32 to vector<1x1xf32>
    %c3_155 = arith.constant 3 : index
    %c1_156 = arith.constant 1 : index
    %395 = vector.load %arg2[%c3_155, %c1_156] : memref<4x2xf32, #tpu.memory_space<vmem>>, vector<1x1xf32>
    tpu.vector_store %arg2[%c3_155, %c1_156], %394 {strides = array<i32>} : memref<4x2xf32, #tpu.memory_space<vmem>>, vector<1x1xf32>,
    return
  }
}

</mosaic_0001>

<llo_original>
// kernel: tpu_custom_call.1
$region0: #{tpu_custom_call.1}
  #allocation0 [shape = 'u32[]', space=smem, size = 0x4, offset = 0x4, fixed_abs, tag = 'smem constant byte address 0x4 - core index']
  #allocation1 [shape = 'u32[144,128]{1,0:T(1,128)}', space=vmem, size = 0x12000, scoped, tag = 'internal scratch']
  %s0 = inlined_call_operand.vmem [shape: f32[4,64,32], index: 0, kind: input, shape index: {}]
  %s1 = inlined_call_operand.vmem [shape: s32[4,1,64], index: 1, kind: input, shape index: {}]
  %s2 = inlined_call_operand.vmem [shape: f32[4,2], index: 2, kind: output, shape index: {}]
  %s3 = sld [smem:[#allocation0]]
  $region18: #{tpu_custom_call.1} parent=0
    _
  %s5 = ssub.s32 1, %s3
  %s6 = scalar_select 0, %s5, %s3
  // Predicated region
  $region2: #{tpu_custom_call.1} parent=0 // pred_check
    _
  $region3: #{tpu_custom_call.1} parent=0 // pred_check_branch
    %8 = sbr.rel (0) target = $region5
  $region4: #{tpu_custom_call.1} parent=0 // pred_region
    _
  $region5: #{tpu_custom_call.1} parent=0 // pred_fallthru
    _
  // Predicated region
  $region6: #{tpu_custom_call.1} parent=0 // pred_check
    _
  $region7: #{tpu_custom_call.1} parent=0 // pred_check_branch
    %10 = sbr.rel (0) target = $region9
  $region8: #{tpu_custom_call.1} parent=0 // pred_region
    _
  $region9: #{tpu_custom_call.1} parent=0 // pred_fallthru
    _
  %v11 = vlaneseq
  %v12 = vshrl.u32 %v11, 7
  %v13 = vadd.s32 %v12, 1
  %v14 = vlaneseq
  %v15 = vand.u32 %v14, 127
  %vm16 = vcmp.ne.s32.totalorder %v12, %v15
  %v17 = vsel %vm16, 1, 0
  %v18 = vcvt.s32.f32 %v17
  %v19 = vmul.f32 %v18, 3.0
  %v20 = vcvt.s32.f32 %v12
  %v21 = vadd.f32 %v20, 1.0
  %v22 = vmul.f32 %v21, 1000003.0
  %v23 = vld [vmem:[%s0] sm:$0xff]
  %v24 = vld [vmem:[%s0 + $0x8] sm:$0xff]
  %v25 = vld [vmem:[%s0 + $0x10] sm:$0xff]
  %v26 = vld [vmem:[%s0 + $0x18] sm:$0xff]
  %v27 = vld [vmem:[%s0 + $0x20] sm:$0xff]
  %v28 = vld [vmem:[%s0 + $0x28] sm:$0xff]
  %v29 = vld [vmem:[%s0 + $0x30] sm:$0xff]
  %v30 = vld [vmem:[%s0 + $0x38] sm:$0xff]
  %v31 = vld [vmem:[%s1] sm:$0x1]
  %v32 = vlaneseq
  %v33 = vshrl.u32 %v32, 7
  %v34 = vsub.s32 0, %v33
  %v35 = vrot.slane %v31, %v34
  %vm36 = vcmp.eq.s32.totalorder %v13, %v35
  %v37 = vsel %vm36, 1, 0
  %v38 = vcvt.s32.f32 %v37
  %vm39 = vcmp.gt.s32.totalorder %v31, 0
  %v40 = vsel %vm39, 1, 0
  %v41 = vcvt.s32.f32 %v40
  %vm42 = vcmask 516096
  %v43 = vsel %vm42, %v41, 0.0
  %44 = vadd.xlane.f32.xlu0 %v43
  %v45 = vpop.xlane.xlu0 %44
  %v46 = vrot.slane %v45, 4
  %v47 = vadd.f32 %v45, %v46
  %v48 = vrot.slane %v47, 2
  %v49 = vadd.f32 %v47, %v48
  %v50 = vrot.slane %v49, 1
  %v51 = vadd.f32 %v49, %v50
  %s52 = vtos %v51
  %vm53 = vcmask 523264
  %v54 = vsel %vm53, %v38, 0.0
  %55 = vadd.xlane.f32.xlu0 %v54
  %v56 = vpop.xlane.xlu0 %55
  %vm57 = vcmp.gt.f32.partialorder %v56, 0.0
  %v58 = vsel %vm57, 1, 0
  %v59 = vcvt.s32.f32 %v58
  %v60 = vmax.f32 %v56, 1.0
  %v61 = vrcp.pop %v60
  %v63 = vsel %vm53, %v38, 0
  %65 = vmatprep.subr.mxu0 0.0
  %66 = vmatpush1.msra.mxu0 %v23
  %67 = vmatprep.subr.mxu0 0.0
  %68 = vmatpush1.msra.mxu0 %v24
  %69 = vmatprep.subr.mxu0 0.0
  %70 = vmatpush1.msra.mxu0 %v25
  %71 = vmatprep.subr.mxu0 0.0
  %72 = vmatpush1.msra.mxu0 %v26
  %73 = vmatprep.subr.mxu0 0.0
  %74 = vmatpush1.msra.mxu0 %v27
  %75 = vmatprep.subr.mxu0 0.0
  %76 = vmatpush1.msra.mxu0 %v28
  %77 = vmatprep.subr.mxu0 0.0
  %78 = vmatpush1.msra.mxu0 %v29
  %79 = vmatprep.subr.mxu0 0.0
  %80 = vmatpush1.msra.mxu0 %v30
  %81 = vmatprep.subr.mxu0 0.0
  %82 = vmatpush1.msra.mxu0 0.0
  %83 = vmatprep.subr.mxu0 0.0
  %84 = vmatpush1.msra.mxu0 0.0
  %85 = vmatprep.subr.mxu0 0.0
  %86 = vmatpush1.msra.mxu0 0.0
  %87 = vmatprep.subr.mxu0 0.0
  %88 = vmatpush1.msra.mxu0 0.0
  %89 = vmatprep.subr.mxu0 0.0
  %90 = vmatpush1.msra.mxu0 0.0
  %91 = vmatprep.subr.mxu0 0.0
  %92 = vmatpush1.msra.mxu0 0.0
  %93 = vmatprep.subr.mxu0 0.0
  %94 = vmatpush1.msra.mxu0 0.0
  %95 = vmatprep.subr.mxu0 0.0
  %96 = vmatpush1.msra.mxu0 0.0
  %97 = vmatprep.subr.mxu0 0.0
  %98 = vmatpush1.msra.mxu0 0.0
  %99 = vmatprep.subr.mxu0 0.0
  %100 = vmatpush1.msra.mxu0 0.0
  %101 = vmatprep.subr.mxu0 0.0
  %102 = vmatpush1.msra.mxu0 0.0
  %103 = vmatprep.subr.mxu0 0.0
  %104 = vmatpush1.msra.mxu0 0.0
  %105 = vmatprep.subr.mxu0 0.0
  %106 = vmatpush1.msra.mxu0 0.0
  %107 = vmatprep.subr.mxu0 0.0
  %108 = vmatpush1.msra.mxu0 0.0
  %109 = vmatprep.subr.mxu0 0.0
  %110 = vmatpush1.msra.mxu0 0.0
  %111 = vmatprep.subr.mxu0 0.0
  %112 = vmatpush1.msra.mxu0 0.0
  %113 = vmatprep.subr.mxu0 0.0
  %114 = vmatpush1.msra.mxu0 0.0
  %115 = vmatprep.subr.mxu0 0.0
  %116 = vmatpush1.msra.mxu0 0.0
  %117 = vmatprep.subr.mxu0 0.0
  %118 = vmatpush1.msra.mxu0 0.0
  %119 = vmatprep.subr.mxu0 0.0
  %120 = vmatpush1.msra.mxu0 0.0
  %121 = vmatprep.subr.mxu0 0.0
  %122 = vmatpush1.msra.mxu0 0.0
  %123 = vmatprep.subr.mxu0 0.0
  %124 = vmatpush1.msra.mxu0 0.0
  %125 = vmatprep.subr.mxu0 0.0
  %126 = vmatpush1.msra.mxu0 0.0
  %127 = vmatprep.subr.mxu0 0.0
  %128 = vmatpush1.msra.mxu0 0.0
  %129 = vmatprep.mubr.f32.mxu0 0.0
  %130 = vmatmul.mubr.f32.gmra.mrb[0].mxu0 %v63
  %v131 = vpop.f32.mrb[0].mxu0
  %v132 = vadd.f32 0.0, %v131
  %v133 = vpop.f32.mrb[0].mxu0
  %134 = vdwg.mxu0
  %v135 = vmul.f32 %v132, %v61
  %136 = vxpose.xlu0.b32.start [1/16] %v38, 128
  %137 = vxpose.xlu0.b32.cont [2/16] 0.0, 128
  %138 = vxpose.xlu0.b32.cont [3/16] 0.0, 128
  %139 = vxpose.xlu0.b32.cont [4/16] 0.0, 128
  %140 = vxpose.xlu0.b32.cont [5/16] 0.0, 128
  %141 = vxpose.xlu0.b32.cont [6/16] 0.0, 128
  %142 = vxpose.xlu0.b32.cont [7/16] 0.0, 128
  %143 = vxpose.xlu0.b32.cont [8/16] 0.0, 128
  %144 = vxpose.xlu0.b32.cont [9/16] 0.0, 128
  %145 = vxpose.xlu0.b32.cont [10/16] 0.0, 128
  %146 = vxpose.xlu0.b32.cont [11/16] 0.0, 128
  %147 = vxpose.xlu0.b32.cont [12/16] 0.0, 128
  %148 = vxpose.xlu0.b32.cont [13/16] 0.0, 128
  %149 = vxpose.xlu0.b32.cont [14/16] 0.0, 128
  %150 = vxpose.xlu0.b32.cont [15/16] 0.0, 128
  %151 = vxpose.xlu0.b32.end [16/16] 0.0, 128
  %v152 = vpop.trf.xlu0
  %v153 = vpop.trf.xlu0
  %v154 = vpop.trf.xlu0
  %v155 = vpop.trf.xlu0
  %v156 = vpop.trf.xlu0
  %v157 = vpop.trf.xlu0
  %v158 = vpop.trf.xlu0
  %v159 = vpop.trf.xlu0
  %v160 = vpop.trf.xlu0
  %v161 = vpop.trf.xlu0
  %v162 = vpop.trf.xlu0
  %v163 = vpop.trf.xlu0
  %v164 = vpop.trf.xlu0
  %v165 = vpop.trf.xlu0
  %v166 = vpop.trf.xlu0
  %v167 = vpop.trf.xlu0
  %vm168 = vcmask 64512
  %v170 = vsel %vm168, %v152, 0
  %v173 = vsel %vm168, %v153, 0
  %v176 = vsel %vm168, %v154, 0
  %v179 = vsel %vm168, %v155, 0
  %v182 = vsel %vm168, %v156, 0
  %v185 = vsel %vm168, %v157, 0
  %v188 = vsel %vm168, %v158, 0
  %v191 = vsel %vm168, %v159, 0
  %193 = vmatprep.subr.mxu0 0.0
  %194 = vmatpush1.msra.mxu0 %v135
  %195 = vmatprep.subr.mxu0 0.0
  %196 = vmatpush1.msra.mxu0 0.0
  %197 = vmatprep.subr.mxu0 0.0
  %198 = vmatpush1.msra.mxu0 0.0
  %199 = vmatprep.subr.mxu0 0.0
  %200 = vmatpush1.msra.mxu0 0.0
  %201 = vmatprep.subr.mxu0 0.0
  %202 = vmatpush1.msra.mxu0 0.0
  %203 = vmatprep.subr.mxu0 0.0
  %204 = vmatpush1.msra.mxu0 0.0
  %205 = vmatprep.subr.mxu0 0.0
  %206 = vmatpush1.msra.mxu0 0.0
  %207 = vmatprep.subr.mxu0 0.0
  %208 = vmatpush1.msra.mxu0 0.0
  %209 = vmatprep.subr.mxu0 0.0
  %210 = vmatpush1.msra.mxu0 0.0
  %211 = vmatprep.subr.mxu0 0.0
  %212 = vmatpush1.msra.mxu0 0.0
  %213 = vmatprep.subr.mxu0 0.0
  %214 = vmatpush1.msra.mxu0 0.0
  %215 = vmatprep.subr.mxu0 0.0
  %216 = vmatpush1.msra.mxu0 0.0
  %217 = vmatprep.subr.mxu0 0.0
  %218 = vmatpush1.msra.mxu0 0.0
  %219 = vmatprep.subr.mxu0 0.0
  %220 = vmatpush1.msra.mxu0 0.0
  %221 = vmatprep.subr.mxu0 0.0
  %222 = vmatpush1.msra.mxu0 0.0
  %223 = vmatprep.subr.mxu0 0.0
  %224 = vmatpush1.msra.mxu0 0.0
  %225 = vmatprep.subr.mxu0 0.0
  %226 = vmatpush1.msra.mxu0 0.0
  %227 = vmatprep.subr.mxu0 0.0
  %228 = vmatpush1.msra.mxu0 0.0
  %229 = vmatprep.subr.mxu0 0.0
  %230 = vmatpush1.msra.mxu0 0.0
  %231 = vmatprep.subr.mxu0 0.0
  %232 = vmatpush1.msra.mxu0 0.0
  %233 = vmatprep.subr.mxu0 0.0
  %234 = vmatpush1.msra.mxu0 0.0
  %235 = vmatprep.subr.mxu0 0.0
  %236 = vmatpush1.msra.mxu0 0.0
  %237 = vmatprep.subr.mxu0 0.0
  %238 = vmatpush1.msra.mxu0 0.0
  %239 = vmatprep.subr.mxu0 0.0
  %240 = vmatpush1.msra.mxu0 0.0
  %241 = vmatprep.subr.mxu0 0.0
  %242 = vmatpush1.msra.mxu0 0.0
  %243 = vmatprep.subr.mxu0 0.0
  %244 = vmatpush1.msra.mxu0 0.0
  %245 = vmatprep.subr.mxu0 0.0
  %246 = vmatpush1.msra.mxu0 0.0
  %247 = vmatprep.subr.mxu0 0.0
  %248 = vmatpush1.msra.mxu0 0.0
  %249 = vmatprep.subr.mxu0 0.0
  %250 = vmatpush1.msra.mxu0 0.0
  %251 = vmatprep.subr.mxu0 0.0
  %252 = vmatpush1.msra.mxu0 0.0
  %253 = vmatprep.subr.mxu0 0.0
  %254 = vmatpush1.msra.mxu0 0.0
  %255 = vmatprep.subr.mxu0 0.0
  %256 = vmatpush1.msra.mxu0 0.0
  %257 = vmatprep.mubr.f32.mxu0 0.0
  %258 = vmatmul.mubr.f32.gmra.mrb[0].mxu0 %v170
  %v259 = vpop.f32.mrb[0].mxu0
  %v260 = vadd.f32 0.0, %v259
  %v261 = vpop.f32.mrb[0].mxu0
  %262 = vmatprep.mubr.f32.mxu0 0.0
  %263 = vmatmul.mubr.f32.gmra.mrb[0].mxu0 %v173
  %v264 = vpop.f32.mrb[0].mxu0
  %v265 = vadd.f32 0.0, %v264
  %v266 = vpop.f32.mrb[0].mxu0
  %267 = vmatprep.mubr.f32.mxu0 0.0
  %268 = vmatmul.mubr.f32.gmra.mrb[0].mxu0 %v176
  %v269 = vpop.f32.mrb[0].mxu0
  %v270 = vadd.f32 0.0, %v269
  %v271 = vpop.f32.mrb[0].mxu0
  %272 = vmatprep.mubr.f32.mxu0 0.0
  %273 = vmatmul.mubr.f32.gmra.mrb[0].mxu0 %v179
  %v274 = vpop.f32.mrb[0].mxu0
  %v275 = vadd.f32 0.0, %v274
  %v276 = vpop.f32.mrb[0].mxu0
  %277 = vmatprep.mubr.f32.mxu0 0.0
  %278 = vmatmul.mubr.f32.gmra.mrb[0].mxu0 %v182
  %v279 = vpop.f32.mrb[0].mxu0
  %v280 = vadd.f32 0.0, %v279
  %v281 = vpop.f32.mrb[0].mxu0
  %282 = vmatprep.mubr.f32.mxu0 0.0
  %283 = vmatmul.mubr.f32.gmra.mrb[0].mxu0 %v185
  %v284 = vpop.f32.mrb[0].mxu0
  %v285 = vadd.f32 0.0, %v284
  %v286 = vpop.f32.mrb[0].mxu0
  %287 = vmatprep.mubr.f32.mxu0 0.0
  %288 = vmatmul.mubr.f32.gmra.mrb[0].mxu0 %v188
  %v289 = vpop.f32.mrb[0].mxu0
  %v290 = vadd.f32 0.0, %v289
  %v291 = vpop.f32.mrb[0].mxu0
  %292 = vmatprep.mubr.f32.mxu0 0.0
  %293 = vmatmul.mubr.f32.gmra.mrb[0].mxu0 %v191
  %v294 = vpop.f32.mrb[0].mxu0
  %v295 = vadd.f32 0.0, %v294
  %v296 = vpop.f32.mrb[0].mxu0
  %297 = vdwg.mxu0
  %v298 = vsub.f32 %v23, %v260
  %v299 = vsub.f32 %v24, %v265
  %v300 = vsub.f32 %v25, %v270
  %v301 = vsub.f32 %v26, %v275
  %v302 = vsub.f32 %v27, %v280
  %v303 = vsub.f32 %v28, %v285
  %v304 = vsub.f32 %v29, %v290
  %v305 = vsub.f32 %v30, %v295
  %v306 = vand.u32 2147483647, %v298
  %v307 = vand.u32 2147483647, %v299
  %v308 = vand.u32 2147483647, %v300
  %v309 = vand.u32 2147483647, %v301
  %v310 = vand.u32 2147483647, %v302
  %v311 = vand.u32 2147483647, %v303
  %v312 = vand.u32 2147483647, %v304
  %v313 = vand.u32 2147483647, %v305
  %vm314 = vcmask 261120
  %v315 = vsel %vm314, %v306, 0.0
  %316 = vadd.xlane.f32.xlu0 %v315
  %v317 = vpop.xlane.xlu0 %316
  %v318 = vsel %vm314, %v307, 0.0
  %319 = vadd.xlane.f32.xlu0 %v318
  %v320 = vpop.xlane.xlu0 %319
  %v321 = vsel %vm314, %v308, 0.0
  %322 = vadd.xlane.f32.xlu0 %v321
  %v323 = vpop.xlane.xlu0 %322
  %v324 = vsel %vm314, %v309, 0.0
  %325 = vadd.xlane.f32.xlu0 %v324
  %v326 = vpop.xlane.xlu0 %325
  %v327 = vsel %vm314, %v310, 0.0
  %328 = vadd.xlane.f32.xlu0 %v327
  %v329 = vpop.xlane.xlu0 %328
  %v330 = vsel %vm314, %v311, 0.0
  %331 = vadd.xlane.f32.xlu0 %v330
  %v332 = vpop.xlane.xlu0 %331
  %v333 = vsel %vm314, %v312, 0.0
  %334 = vadd.xlane.f32.xlu0 %v333
  %v335 = vpop.xlane.xlu0 %334
  %v336 = vsel %vm314, %v313, 0.0
  %337 = vadd.xlane.f32.xlu0 %v336
  %v338 = vpop.xlane.xlu0 %337
  %v339 = vsub.f32 %v317, 0.5
  %v340 = vsub.f32 %v320, 0.5
  %v341 = vsub.f32 %v323, 0.5
  %v342 = vsub.f32 %v326, 0.5
  %v343 = vsub.f32 %v329, 0.5
  %v344 = vsub.f32 %v332, 0.5
  %v345 = vsub.f32 %v335, 0.5
  %v346 = vsub.f32 %v338, 0.5
  %v347 = vmax.f32 %v339, 0.0
  %v348 = vmax.f32 %v340, 0.0
  %v349 = vmax.f32 %v341, 0.0
  %v350 = vmax.f32 %v342, 0.0
  %v351 = vmax.f32 %v343, 0.0
  %v352 = vmax.f32 %v344, 0.0
  %v353 = vmax.f32 %v345, 0.0
  %v354 = vmax.f32 %v346, 0.0
  %v355 = vmul.f32 %v347, %v347
  %v356 = vmul.f32 %v348, %v348
  %v357 = vmul.f32 %v349, %v349
  %v358 = vmul.f32 %v350, %v350
  %v359 = vmul.f32 %v351, %v351
  %v360 = vmul.f32 %v352, %v352
  %v361 = vmul.f32 %v353, %v353
  %v362 = vmul.f32 %v354, %v354
  %363 = vmatprep.subr.mxu0 0.0
  %364 = vmatpush1.msra.mxu0 %v355
  %365 = vmatprep.subr.mxu0 0.0
  %366 = vmatpush1.msra.mxu0 %v356
  %367 = vmatprep.subr.mxu0 0.0
  %368 = vmatpush1.msra.mxu0 %v357
  %369 = vmatprep.subr.mxu0 0.0
  %370 = vmatpush1.msra.mxu0 %v358
  %371 = vmatprep.subr.mxu0 0.0
  %372 = vmatpush1.msra.mxu0 %v359
  %373 = vmatprep.subr.mxu0 0.0
  %374 = vmatpush1.msra.mxu0 %v360
  %375 = vmatprep.subr.mxu0 0.0
  %376 = vmatpush1.msra.mxu0 %v361
  %377 = vmatprep.subr.mxu0 0.0
  %378 = vmatpush1.msra.mxu0 %v362
  %379 = vmatprep.subr.mxu0 0.0
  %380 = vmatpush1.msra.mxu0 0.0
  %381 = vmatprep.subr.mxu0 0.0
  %382 = vmatpush1.msra.mxu0 0.0
  %383 = vmatprep.subr.mxu0 0.0
  %384 = vmatpush1.msra.mxu0 0.0
  %385 = vmatprep.subr.mxu0 0.0
  %386 = vmatpush1.msra.mxu0 0.0
  %387 = vmatprep.subr.mxu0 0.0
  %388 = vmatpush1.msra.mxu0 0.0
  %389 = vmatprep.subr.mxu0 0.0
  %390 = vmatpush1.msra.mxu0 0.0
  %391 = vmatprep.subr.mxu0 0.0
  %392 = vmatpush1.msra.mxu0 0.0
  %393 = vmatprep.subr.mxu0 0.0
  %394 = vmatpush1.msra.mxu0 0.0
  %395 = vmatprep.subr.mxu0 0.0
  %396 = vmatpush1.msra.mxu0 0.0
  %397 = vmatprep.subr.mxu0 0.0
  %398 = vmatpush1.msra.mxu0 0.0
  %399 = vmatprep.subr.mxu0 0.0
  %400 = vmatpush1.msra.mxu0 0.0
  %401 = vmatprep.subr.mxu0 0.0
  %402 = vmatpush1.msra.mxu0 0.0
  %403 = vmatprep.subr.mxu0 0.0
  %404 = vmatpush1.msra.mxu0 0.0
  %405 = vmatprep.subr.mxu0 0.0
  %406 = vmatpush1.msra.mxu0 0.0
  %407 = vmatprep.subr.mxu0 0.0
  %408 = vmatpush1.msra.mxu0 0.0
  %409 = vmatprep.subr.mxu0 0.0
  %410 = vmatpush1.msra.mxu0 0.0
  %411 = vmatprep.subr.mxu0 0.0
  %412 = vmatpush1.msra.mxu0 0.0
  %413 = vmatprep.subr.mxu0 0.0
  %414 = vmatpush1.msra.mxu0 0.0
  %415 = vmatprep.subr.mxu0 0.0
  %416 = vmatpush1.msra.mxu0 0.0
  %417 = vmatprep.subr.mxu0 0.0
  %418 = vmatpush1.msra.mxu0 0.0
  %419 = vmatprep.subr.mxu0 0.0
  %420 = vmatpush1.msra.mxu0 0.0
  %421 = vmatprep.subr.mxu0 0.0
  %422 = vmatpush1.msra.mxu0 0.0
  %423 = vmatprep.subr.mxu0 0.0
  %424 = vmatpush1.msra.mxu0 0.0
  %425 = vmatprep.subr.mxu0 0.0
  %426 = vmatpush1.msra.mxu0 0.0
  %427 = vmatprep.mubr.f32.mxu0 0.0
  %428 = vmatmul.mubr.f32.gmra.mrb[0].mxu0 %v63
  %v429 = vpop.f32.mrb[0].mxu0
  %v430 = vadd.f32 0.0, %v429
  %v431 = vpop.f32.mrb[0].mxu0
  %432 = vdwg.mxu0
  %vm433 = vcmask 7168
  %v434 = vsel %vm433, %v59, 0.0
  %435 = vadd.xlane.f32.xlu0 %v434
  %v436 = vpop.xlane.xlu0 %435
  %v437 = vrot.slane %v436, 4
  %v438 = vadd.f32 %v436, %v437
  %v439 = vrot.slane %v438, 2
  %v440 = vadd.f32 %v438, %v439
  %v441 = vrot.slane %v440, 1
  %v442 = vadd.f32 %v440, %v441
  %s443 = vtos %v442
  %s444 = smax.f32 %s443, 1.0
  %v445 = vmul.f32 %v430, %v61
  %v446 = vsel %vm433, %v445, 0.0
  %447 = vadd.xlane.f32.xlu0 %v446
  %v448 = vpop.xlane.xlu0 %447
  %v449 = vrot.slane %v448, 4
  %v450 = vadd.f32 %v448, %v449
  %v451 = vrot.slane %v450, 2
  %v452 = vadd.f32 %v450, %v451
  %v453 = vrot.slane %v452, 1
  %v454 = vadd.f32 %v452, %v453
  %s455 = vtos %v454
  %v456 = vstv %s444
  %v457 = vrcp.pop %v456
  %s458 = vtos %v457
  %s459 = smul.f32 %s455, %s458
  %v460 = vsub.f32 1.0, %v59
  %v461 = vmul.f32 %v460, %v22
  %v462 = vadd.f32 %v135, %v461
  %v464 = vcombine.high %v462, %v462
  %v466 = vunpack.c.l.s4 1966171168
  %v467 = vunpack.c.0.s8 %v466
  %v468 = vlaneseq
  %v469 = vshrl.u32 %v468, 7
  %v470 = vsub.s32 %v467, %v469
  %v471 = vrot.slane %v462, %v470
  %v473 = vunpack.c.l.s4 1966171168
  %v474 = vunpack.c.0.s8 %v473
  %v475 = vlaneseq
  %v476 = vshrl.u32 %v475, 7
  %v477 = vsub.s32 %v474, %v476
  %v478 = vrot.slane %v464, %v477
  %v479 = vcombine.high %v471, %v471
  %v480 = vcombine.high %v478, %v478
  %v482 = vunpack.c.l.s4 1966171168
  %v483 = vunpack.c.0.s8 %v482
  %v484 = vlaneseq
  %v485 = vshrl.u32 %v484, 7
  %v486 = vsub.s32 %v483, %v485
  %v487 = vrot.slane %v471, %v486
  %v489 = vunpack.c.l.s4 1966171168
  %v490 = vunpack.c.0.s8 %v489
  %v491 = vlaneseq
  %v492 = vshrl.u32 %v491, 7
  %v493 = vsub.s32 %v490, %v492
  %v494 = vrot.slane %v478, %v493
  %v496 = vunpack.c.l.s4 1966171168
  %v497 = vunpack.c.0.s8 %v496
  %v498 = vlaneseq
  %v499 = vshrl.u32 %v498, 7
  %v500 = vsub.s32 %v497, %v499
  %v501 = vrot.slane %v479, %v500
  %v503 = vunpack.c.l.s4 1966171168
  %v504 = vunpack.c.0.s8 %v503
  %v505 = vlaneseq
  %v506 = vshrl.u32 %v505, 7
  %v507 = vsub.s32 %v504, %v506
  %v508 = vrot.slane %v480, %v507
  %v509 = vcombine.high %v487, %v487
  %v510 = vcombine.high %v494, %v494
  %v511 = vcombine.high %v501, %v501
  %v512 = vcombine.high %v508, %v508
  %v513 = vlaneseq
  %v514 = vshrl.u32 %v513, 7
  %v515 = vsub.s32 0, %v514
  %v516 = vrot.slane %v487, %v515
  %v517 = vlaneseq
  %v518 = vshrl.u32 %v517, 7
  %v519 = vsub.s32 0, %v518
  %v520 = vrot.slane %v501, %v519
  %v521 = vlaneseq
  %v522 = vshrl.u32 %v521, 7
  %v523 = vsub.s32 0, %v522
  %v524 = vrot.slane %v509, %v523
  %v525 = vlaneseq
  %v526 = vshrl.u32 %v525, 7
  %v527 = vsub.s32 0, %v526
  %v528 = vrot.slane %v511, %v527
  %v529 = vlaneseq
  %v530 = vshrl.u32 %v529, 7
  %v531 = vsub.s32 0, %v530
  %v532 = vrot.slane %v494, %v531
  %v533 = vlaneseq
  %v534 = vshrl.u32 %v533, 7
  %v535 = vsub.s32 0, %v534
  %v536 = vrot.slane %v508, %v535
  %v537 = vlaneseq
  %v538 = vshrl.u32 %v537, 7
  %v539 = vsub.s32 0, %v538
  %v540 = vrot.slane %v510, %v539
  %v541 = vlaneseq
  %v542 = vshrl.u32 %v541, 7
  %v543 = vsub.s32 0, %v542
  %v544 = vrot.slane %v512, %v543
  %v553 = vsub.f32 %v516, %v462
  %v554 = vsub.f32 %v520, %v462
  %v555 = vsub.f32 %v524, %v462
  %v556 = vsub.f32 %v528, %v462
  %v557 = vsub.f32 %v532, %v462
  %v558 = vsub.f32 %v536, %v462
  %v559 = vsub.f32 %v540, %v462
  %v560 = vsub.f32 %v544, %v462
  %v561 = vand.u32 2147483647, %v553
  %v562 = vand.u32 2147483647, %v554
  %v563 = vand.u32 2147483647, %v555
  %v564 = vand.u32 2147483647, %v556
  %v565 = vand.u32 2147483647, %v557
  %v566 = vand.u32 2147483647, %v558
  %v567 = vand.u32 2147483647, %v559
  %v568 = vand.u32 2147483647, %v560
  %v569 = vsel %vm314, %v561, 0.0
  %570 = vadd.xlane.f32.xlu0 %v569
  %v571 = vpop.xlane.xlu0 %570
  %v572 = vsel %vm314, %v562, 0.0
  %573 = vadd.xlane.f32.xlu0 %v572
  %v574 = vpop.xlane.xlu0 %573
  %v575 = vsel %vm314, %v563, 0.0
  %576 = vadd.xlane.f32.xlu0 %v575
  %v577 = vpop.xlane.xlu0 %576
  %v578 = vsel %vm314, %v564, 0.0
  %579 = vadd.xlane.f32.xlu0 %v578
  %v580 = vpop.xlane.xlu0 %579
  %v581 = vsel %vm314, %v565, 0.0
  %582 = vadd.xlane.f32.xlu0 %v581
  %v583 = vpop.xlane.xlu0 %582
  %v584 = vsel %vm314, %v566, 0.0
  %585 = vadd.xlane.f32.xlu0 %v584
  %v586 = vpop.xlane.xlu0 %585
  %v587 = vsel %vm314, %v567, 0.0
  %588 = vadd.xlane.f32.xlu0 %v587
  %v589 = vpop.xlane.xlu0 %588
  %v590 = vsel %vm314, %v568, 0.0
  %591 = vadd.xlane.f32.xlu0 %v590
  %v592 = vpop.xlane.xlu0 %591
  %v601 = vlaneseq
  %v602 = vshrl.u32 %v601, 7
  %v603 = vsub.s32 %v15, %v602
  %v604 = vrot.slane %v571, %v603
  %v605 = vlaneseq
  %v606 = vshrl.u32 %v605, 7
  %v607 = vsub.s32 %v15, %v606
  %v608 = vrot.slane %v574, %v607
  %v609 = vlaneseq
  %v610 = vshrl.u32 %v609, 7
  %v611 = vsub.s32 %v15, %v610
  %v612 = vrot.slane %v577, %v611
  %v613 = vlaneseq
  %v614 = vshrl.u32 %v613, 7
  %v615 = vsub.s32 %v15, %v614
  %v616 = vrot.slane %v580, %v615
  %v617 = vlaneseq
  %v618 = vshrl.u32 %v617, 7
  %v619 = vsub.s32 %v15, %v618
  %v620 = vrot.slane %v583, %v619
  %v621 = vlaneseq
  %v622 = vshrl.u32 %v621, 7
  %v623 = vsub.s32 %v15, %v622
  %v624 = vrot.slane %v586, %v623
  %v625 = vlaneseq
  %v626 = vshrl.u32 %v625, 7
  %v627 = vsub.s32 %v15, %v626
  %v628 = vrot.slane %v589, %v627
  %v629 = vlaneseq
  %v630 = vshrl.u32 %v629, 7
  %v631 = vsub.s32 %v15, %v630
  %v632 = vrot.slane %v592, %v631
  %vm633 = vcmask 1041409
  %v634 = vsel %vm633, %v608, %v604
  %vm635 = vcmask 1042434
  %v636 = vsel %vm635, %v612, %v634
  %vm637 = vcmask 1043459
  %v638 = vsel %vm637, %v616, %v636
  %vm639 = vcmask 1044484
  %v640 = vsel %vm639, %v620, %v638
  %vm641 = vcmask 1045509
  %v642 = vsel %vm641, %v624, %v640
  %vm643 = vcmask 1046534
  %v644 = vsel %vm643, %v628, %v642
  %vm645 = vcmask 1047559
  %v646 = vsel %vm645, %v632, %v644
  %v648 = vsub.f32 %v19, %v646
  %v649 = vmax.f32 %v648, 0.0
  %v650 = vmul.f32 %v649, %v649
  %v651 = vsel %vm168, %v650, 0.0
  %652 = vadd.xlane.f32.xlu0 %v651
  %v653 = vpop.xlane.xlu0 %652
  %v654 = vrot.slane %v653, 4
  %v655 = vadd.f32 %v653, %v654
  %v656 = vrot.slane %v655, 2
  %v657 = vadd.f32 %v655, %v656
  %v658 = vrot.slane %v657, 1
  %v659 = vadd.f32 %v657, %v658
  %s660 = vtos %v659
  %s661 = smul.f32 %s443, 2.0
  %s662 = ssub.f32 %s443, 1.0
  %s663 = sadd.f32 %s662, 1e-10
  %s664 = smul.f32 %s661, %s663
  %p665 = scmp.gt.f32.partialorder %s443, 0.5
  %s666 = sadd.f32 %s660, 1e-10
  %s667 = scalar_select %p665, %s664, 1.0
  %v668 = vstv %s667
  %v669 = vrcp.pop %v668
  %s670 = vtos %v669
  %s671 = smul.f32 %s666, %s670
  %s672 = scalar_select %p665, %s671, 0.0
  %v673 = vand.u32 2147483647, %v135
  %v674 = vsel %vm314, %v673, 0.0
  %675 = vadd.xlane.f32.xlu0 %v674
  %v676 = vpop.xlane.xlu0 %675
  %v677 = vrot.slane %v676, 4
  %v678 = vadd.f32 %v676, %v677
  %v679 = vrot.slane %v678, 2
  %v680 = vadd.f32 %v678, %v679
  %v681 = vrot.slane %v680, 1
  %v682 = vadd.f32 %v680, %v681
  %s683 = vtos %v682
  %v684 = vstv %s444
  %v685 = vrcp.pop %v684
  %s686 = vtos %v685
  %s687 = smul.f32 %s683, %s686
  %s688 = sadd.f32 %s459, %s672
  %s689 = smul.f32 %s687, 0.001
  %s690 = sadd.f32 %s688, %s689
  %v691 = vstv %s690
  %vm692 = vcmask 0
  %693 = vst.msk [vmem:[%s2] sm:$0x1] %vm692, %v691
  %v694 = vstv %s52
  %vm695 = vcmask 8200
  %696 = vst.msk [vmem:[%s2] sm:$0x1] %vm695, %v694
  %s697 = scalar_lea.vmem %s0, 64
  %v698 = vld [vmem:[%s697] sm:$0xff]
  %v699 = vld [vmem:[%s697 + $0x8] sm:$0xff]
  %v700 = vld [vmem:[%s697 + $0x10] sm:$0xff]
  %v701 = vld [vmem:[%s697 + $0x18] sm:$0xff]
  %v702 = vld [vmem:[%s697 + $0x20] sm:$0xff]
  %v703 = vld [vmem:[%s697 + $0x28] sm:$0xff]
  %v704 = vld [vmem:[%s697 + $0x30] sm:$0xff]
  %v705 = vld [vmem:[%s697 + $0x38] sm:$0xff]
  %s706 = scalar_lea.vmem %s1, 1
  %v707 = vld [vmem:[%s706] sm:$0x1]
  %v708 = vlaneseq
  %v709 = vshrl.u32 %v708, 7
  %v710 = vsub.s32 0, %v709
  %v711 = vrot.slane %v707, %v710
  %vm712 = vcmp.eq.s32.totalorder %v13, %v711
  %v713 = vsel %vm712, 1, 0
  %v714 = vcvt.s32.f32 %v713
  %vm715 = vcmp.gt.s32.totalorder %v707, 0
  %v716 = vsel %vm715, 1, 0
  %v717 = vcvt.s32.f32 %v716
  %v718 = vsel %vm42, %v717, 0.0
  %719 = vadd.xlane.f32.xlu0 %v718
  %v720 = vpop.xlane.xlu0 %719
  %v721 = vrot.slane %v720, 4
  %v722 = vadd.f32 %v720, %v721
  %v723 = vrot.slane %v722, 2
  %v724 = vadd.f32 %v722, %v723
  %v725 = vrot.slane %v724, 1
  %v726 = vadd.f32 %v724, %v725
  %s727 = vtos %v726
  %v728 = vsel %vm53, %v714, 0.0
  %729 = vadd.xlane.f32.xlu0 %v728
  %v730 = vpop.xlane.xlu0 %729
  %vm731 = vcmp.gt.f32.partialorder %v730, 0.0
  %v732 = vsel %vm731, 1, 0
  %v733 = vcvt.s32.f32 %v732
  %v734 = vmax.f32 %v730, 1.0
  %v735 = vrcp.pop %v734
  %v737 = vsel %vm53, %v714, 0
  %739 = vmatprep.subr.mxu0 0.0
  %740 = vmatpush1.msra.mxu0 %v698
  %741 = vmatprep.subr.mxu0 0.0
  %742 = vmatpush1.msra.mxu0 %v699
  %743 = vmatprep.subr.mxu0 0.0
  %744 = vmatpush1.msra.mxu0 %v700
  %745 = vmatprep.subr.mxu0 0.0
  %746 = vmatpush1.msra.mxu0 %v701
  %747 = vmatprep.subr.mxu0 0.0
  %748 = vmatpush1.msra.mxu0 %v702
  %749 = vmatprep.subr.mxu0 0.0
  %750 = vmatpush1.msra.mxu0 %v703
  %751 = vmatprep.subr.mxu0 0.0
  %752 = vmatpush1.msra.mxu0 %v704
  %753 = vmatprep.subr.mxu0 0.0
  %754 = vmatpush1.msra.mxu0 %v705
  %755 = vmatprep.subr.mxu0 0.0
  %756 = vmatpush1.msra.mxu0 0.0
  %757 = vmatprep.subr.mxu0 0.0
  %758 = vmatpush1.msra.mxu0 0.0
  %759 = vmatprep.subr.mxu0 0.0
  %760 = vmatpush1.msra.mxu0 0.0
  %761 = vmatprep.subr.mxu0 0.0
  %762 = vmatpush1.msra.mxu0 0.0
  %763 = vmatprep.subr.mxu0 0.0
  %764 = vmatpush1.msra.mxu0 0.0
  %765 = vmatprep.subr.mxu0 0.0
  %766 = vmatpush1.msra.mxu0 0.0
  %767 = vmatprep.subr.mxu0 0.0
  %768 = vmatpush1.msra.mxu0 0.0
  %769 = vmatprep.subr.mxu0 0.0
  %770 = vmatpush1.msra.mxu0 0.0
  %771 = vmatprep.subr.mxu0 0.0
  %772 = vmatpush1.msra.mxu0 0.0
  %773 = vmatprep.subr.mxu0 0.0
  %774 = vmatpush1.msra.mxu0 0.0
  %775 = vmatprep.subr.mxu0 0.0
  %776 = vmatpush1.msra.mxu0 0.0
  %777 = vmatprep.subr.mxu0 0.0
  %778 = vmatpush1.msra.mxu0 0.0
  %779 = vmatprep.subr.mxu0 0.0
  %780 = vmatpush1.msra.mxu0 0.0
  %781 = vmatprep.subr.mxu0 0.0
  %782 = vmatpush1.msra.mxu0 0.0
  %783 = vmatprep.subr.mxu0 0.0
  %784 = vmatpush1.msra.mxu0 0.0
  %785 = vmatprep.subr.mxu0 0.0
  %786 = vmatpush1.msra.mxu0 0.0
  %787 = vmatprep.subr.mxu0 0.0
  %788 = vmatpush1.msra.mxu0 0.0
  %789 = vmatprep.subr.mxu0 0.0
  %790 = vmatpush1.msra.mxu0 0.0
  %791 = vmatprep.subr.mxu0 0.0
  %792 = vmatpush1.msra.mxu0 0.0
  %793 = vmatprep.subr.mxu0 0.0
  %794 = vmatpush1.msra.mxu0 0.0
  %795 = vmatprep.subr.mxu0 0.0
  %796 = vmatpush1.msra.mxu0 0.0
  %797 = vmatprep.subr.mxu0 0.0
  %798 = vmatpush1.msra.mxu0 0.0
  %799 = vmatprep.subr.mxu0 0.0
  %800 = vmatpush1.msra.mxu0 0.0
  %801 = vmatprep.subr.mxu0 0.0
  %802 = vmatpush1.msra.mxu0 0.0
  %803 = vmatprep.mubr.f32.mxu0 0.0
  %804 = vmatmul.mubr.f32.gmra.mrb[0].mxu0 %v737
  %v805 = vpop.f32.mrb[0].mxu0
  %v806 = vadd.f32 0.0, %v805
  %v807 = vpop.f32.mrb[0].mxu0
  %808 = vdwg.mxu0
  %v809 = vmul.f32 %v806, %v735
  %810 = vxpose.xlu0.b32.start [1/16] %v714, 128
  %811 = vxpose.xlu0.b32.cont [2/16] 0.0, 128
  %812 = vxpose.xlu0.b32.cont [3/16] 0.0, 128
  %813 = vxpose.xlu0.b32.cont [4/16] 0.0, 128
  %814 = vxpose.xlu0.b32.cont [5/16] 0.0, 128
  %815 = vxpose.xlu0.b32.cont [6/16] 0.0, 128
  %816 = vxpose.xlu0.b32.cont [7/16] 0.0, 128
  %817 = vxpose.xlu0.b32.cont [8/16] 0.0, 128
  %818 = vxpose.xlu0.b32.cont [9/16] 0.0, 128
  %819 = vxpose.xlu0.b32.cont [10/16] 0.0, 128
  %820 = vxpose.xlu0.b32.cont [11/16] 0.0, 128
  %821 = vxpose.xlu0.b32.cont [12/16] 0.0, 128
  %822 = vxpose.xlu0.b32.cont [13/16] 0.0, 128
  %823 = vxpose.xlu0.b32.cont [14/16] 0.0, 128
  %824 = vxpose.xlu0.b32.cont [15/16] 0.0, 128
  %825 = vxpose.xlu0.b32.end [16/16] 0.0, 128
  %v826 = vpop.trf.xlu0
  %v827 = vpop.trf.xlu0
  %v828 = vpop.trf.xlu0
  %v829 = vpop.trf.xlu0
  %v830 = vpop.trf.xlu0
  %v831 = vpop.trf.xlu0
  %v832 = vpop.trf.xlu0
  %v833 = vpop.trf.xlu0
  %v834 = vpop.trf.xlu0
  %v835 = vpop.trf.xlu0
  %v836 = vpop.trf.xlu0
  %v837 = vpop.trf.xlu0
  %v838 = vpop.trf.xlu0
  %v839 = vpop.trf.xlu0
  %v840 = vpop.trf.xlu0
  %v841 = vpop.trf.xlu0
  %v843 = vsel %vm168, %v826, 0
  %v846 = vsel %vm168, %v827, 0
  %v849 = vsel %vm168, %v828, 0
  %v852 = vsel %vm168, %v829, 0
  %v855 = vsel %vm168, %v830, 0
  %v858 = vsel %vm168, %v831, 0
  %v861 = vsel %vm168, %v832, 0
  %v864 = vsel %vm168, %v833, 0
  %866 = vmatprep.subr.mxu0 0.0
  %867 = vmatpush1.msra.mxu0 %v809
  %868 = vmatprep.subr.mxu0 0.0
  %869 = vmatpush1.msra.mxu0 0.0
  %870 = vmatprep.subr.mxu0 0.0
  %871 = vmatpush1.msra.mxu0 0.0
  %872 = vmatprep.subr.mxu0 0.0
  %873 = vmatpush1.msra.mxu0 0.0
  %874 = vmatprep.subr.mxu0 0.0
  %875 = vmatpush1.msra.mxu0 0.0
  %876 = vmatprep.subr.mxu0 0.0
  %877 = vmatpush1.msra.mxu0 0.0
  %878 = vmatprep.subr.mxu0 0.0
  %879 = vmatpush1.msra.mxu0 0.0
  %880 = vmatprep.subr.mxu0 0.0
  %881 = vmatpush1.msra.mxu0 0.0
  %882 = vmatprep.subr.mxu0 0.0
  %883 = vmatpush1.msra.mxu0 0.0
  %884 = vmatprep.subr.mxu0 0.0
  %885 = vmatpush1.msra.mxu0 0.0
  %886 = vmatprep.subr.mxu0 0.0
  %887 = vmatpush1.msra.mxu0 0.0
  %888 = vmatprep.subr.mxu0 0.0
  %889 = vmatpush1.msra.mxu0 0.0
  %890 = vmatprep.subr.mxu0 0.0
  %891 = vmatpush1.msra.mxu0 0.0
  %892 = vmatprep.subr.mxu0 0.0
  %893 = vmatpush1.msra.mxu0 0.0
  %894 = vmatprep.subr.mxu0 0.0
  %895 = vmatpush1.msra.mxu0 0.0
  %896 = vmatprep.subr.mxu0 0.0
  %897 = vmatpush1.msra.mxu0 0.0
  %898 = vmatprep.subr.mxu0 0.0
  %899 = vmatpush1.msra.mxu0 0.0
  %900 = vmatprep.subr.mxu0 0.0
  %901 = vmatpush1.msra.mxu0 0.0
  %902 = vmatprep.subr.mxu0 0.0
  %903 = vmatpush1.msra.mxu0 0.0
  %904 = vmatprep.subr.mxu0 0.0
  %905 = vmatpush1.msra.mxu0 0.0
  %906 = vmatprep.subr.mxu0 0.0
  %907 = vmatpush1.msra.mxu0 0.0
  %908 = vmatprep.subr.mxu0 0.0
  %909 = vmatpush1.msra.mxu0 0.0
  %910 = vmatprep.subr.mxu0 0.0
  %911 = vmatpush1.msra.mxu0 0.0
  %912 = vmatprep.subr.mxu0 0.0
  %913 = vmatpush1.msra.mxu0 0.0
  %914 = vmatprep.subr.mxu0 0.0
  %915 = vmatpush1.msra.mxu0 0.0
  %916 = vmatprep.subr.mxu0 0.0
  %917 = vmatpush1.msra.mxu0 0.0
  %918 = vmatprep.subr.mxu0 0.0
  %919 = vmatpush1.msra.mxu0 0.0
  %920 = vmatprep.subr.mxu0 0.0
  %921 = vmatpush1.msra.mxu0 0.0
  %922 = vmatprep.subr.mxu0 0.0
  %923 = vmatpush1.msra.mxu0 0.0
  %924 = vmatprep.subr.mxu0 0.0
  %925 = vmatpush1.msra.mxu0 0.0
  %926 = vmatprep.subr.mxu0 0.0
  %927 = vmatpush1.msra.mxu0 0.0
  %928 = vmatprep.subr.mxu0 0.0
  %929 = vmatpush1.msra.mxu0 0.0
  %930 = vmatprep.mubr.f32.mxu0 0.0
  %931 = vmatmul.mubr.f32.gmra.mrb[0].mxu0 %v843
  %v932 = vpop.f32.mrb[0].mxu0
  %v933 = vadd.f32 0.0, %v932
  %v934 = vpop.f32.mrb[0].mxu0
  %935 = vmatprep.mubr.f32.mxu0 0.0
  %936 = vmatmul.mubr.f32.gmra.mrb[0].mxu0 %v846
  %v937 = vpop.f32.mrb[0].mxu0
  %v938 = vadd.f32 0.0, %v937
  %v939 = vpop.f32.mrb[0].mxu0
  %940 = vmatprep.mubr.f32.mxu0 0.0
  %941 = vmatmul.mubr.f32.gmra.mrb[0].mxu0 %v849
  %v942 = vpop.f32.mrb[0].mxu0
  %v943 = vadd.f32 0.0, %v942
  %v944 = vpop.f32.mrb[0].mxu0
  %945 = vmatprep.mubr.f32.mxu0 0.0
  %946 = vmatmul.mubr.f32.gmra.mrb[0].mxu0 %v852
  %v947 = vpop.f32.mrb[0].mxu0
  %v948 = vadd.f32 0.0, %v947
  %v949 = vpop.f32.mrb[0].mxu0
  %950 = vmatprep.mubr.f32.mxu0 0.0
  %951 = vmatmul.mubr.f32.gmra.mrb[0].mxu0 %v855
  %v952 = vpop.f32.mrb[0].mxu0
  %v953 = vadd.f32 0.0, %v952
  %v954 = vpop.f32.mrb[0].mxu0
  %955 = vmatprep.mubr.f32.mxu0 0.0
  %956 = vmatmul.mubr.f32.gmra.mrb[0].mxu0 %v858
  %v957 = vpop.f32.mrb[0].mxu0
  %v958 = vadd.f32 0.0, %v957
  %v959 = vpop.f32.mrb[0].mxu0
  %960 = vmatprep.mubr.f32.mxu0 0.0
  %961 = vmatmul.mubr.f32.gmra.mrb[0].mxu0 %v861
  %v962 = vpop.f32.mrb[0].mxu0
  %v963 = vadd.f32 0.0, %v962
  %v964 = vpop.f32.mrb[0].mxu0
  %965 = vmatprep.mubr.f32.mxu0 0.0
  %966 = vmatmul.mubr.f32.gmra.mrb[0].mxu0 %v864
  %v967 = vpop.f32.mrb[0].mxu0
  %v968 = vadd.f32 0.0, %v967
  %v969 = vpop.f32.mrb[0].mxu0
  %970 = vdwg.mxu0
  %v971 = vsub.f32 %v698, %v933
  %v972 = vsub.f32 %v699, %v938
  %v973 = vsub.f32 %v700, %v943
  %v974 = vsub.f32 %v701, %v948
  %v975 = vsub.f32 %v702, %v953
  %v976 = vsub.f32 %v703, %v958
  %v977 = vsub.f32 %v704, %v963
  %v978 = vsub.f32 %v705, %v968
  %v979 = vand.u32 2147483647, %v971
  %v980 = vand.u32 2147483647, %v972
  %v981 = vand.u32 2147483647, %v973
  %v982 = vand.u32 2147483647, %v974
  %v983 = vand.u32 2147483647, %v975
  %v984 = vand.u32 2147483647, %v976
  %v985 = vand.u32 2147483647, %v977
  %v986 = vand.u32 2147483647, %v978
  %v987 = vsel %vm314, %v979, 0.0
  %988 = vadd.xlane.f32.xlu0 %v987
  %v989 = vpop.xlane.xlu0 %988
  %v990 = vsel %vm314, %v980, 0.0
  %991 = vadd.xlane.f32.xlu0 %v990
  %v992 = vpop.xlane.xlu0 %991
  %v993 = vsel %vm314, %v981, 0.0
  %994 = vadd.xlane.f32.xlu0 %v993
  %v995 = vpop.xlane.xlu0 %994
  %v996 = vsel %vm314, %v982, 0.0
  %997 = vadd.xlane.f32.xlu0 %v996
  %v998 = vpop.xlane.xlu0 %997
  %v999 = vsel %vm314, %v983, 0.0
  %1000 = vadd.xlane.f32.xlu0 %v999
  %v1001 = vpop.xlane.xlu0 %1000
  %v1002 = vsel %vm314, %v984, 0.0
  %1003 = vadd.xlane.f32.xlu0 %v1002
  %v1004 = vpop.xlane.xlu0 %1003
  %v1005 = vsel %vm314, %v985, 0.0
  %1006 = vadd.xlane.f32.xlu0 %v1005
  %v1007 = vpop.xlane.xlu0 %1006
  %v1008 = vsel %vm314, %v986, 0.0
  %1009 = vadd.xlane.f32.xlu0 %v1008
  %v1010 = vpop.xlane.xlu0 %1009
  %v1011 = vsub.f32 %v989, 0.5
  %v1012 = vsub.f32 %v992, 0.5
  %v1013 = vsub.f32 %v995, 0.5
  %v1014 = vsub.f32 %v998, 0.5
  %v1015 = vsub.f32 %v1001, 0.5
  %v1016 = vsub.f32 %v1004, 0.5
  %v1017 = vsub.f32 %v1007, 0.5
  %v1018 = vsub.f32 %v1010, 0.5
  %v1019 = vmax.f32 %v1011, 0.0
  %v1020 = vmax.f32 %v1012, 0.0
  %v1021 = vmax.f32 %v1013, 0.0
  %v1022 = vmax.f32 %v1014, 0.0
  %v1023 = vmax.f32 %v1015, 0.0
  %v1024 = vmax.f32 %v1016, 0.0
  %v1025 = vmax.f32 %v1017, 0.0
  %v1026 = vmax.f32 %v1018, 0.0
  %v1027 = vmul.f32 %v1019, %v1019
  %v1028 = vmul.f32 %v1020, %v1020
  %v1029 = vmul.f32 %v1021, %v1021
  %v1030 = vmul.f32 %v1022, %v1022
  %v1031 = vmul.f32 %v1023, %v1023
  %v1032 = vmul.f32 %v1024, %v1024
  %v1033 = vmul.f32 %v1025, %v1025
  %v1034 = vmul.f32 %v1026, %v1026
  %1035 = vmatprep.subr.mxu0 0.0
  %1036 = vmatpush1.msra.mxu0 %v1027
  %1037 = vmatprep.subr.mxu0 0.0
  %1038 = vmatpush1.msra.mxu0 %v1028
  %1039 = vmatprep.subr.mxu0 0.0
  %1040 = vmatpush1.msra.mxu0 %v1029
  %1041 = vmatprep.subr.mxu0 0.0
  %1042 = vmatpush1.msra.mxu0 %v1030
  %1043 = vmatprep.subr.mxu0 0.0
  %1044 = vmatpush1.msra.mxu0 %v1031
  %1045 = vmatprep.subr.mxu0 0.0
  %1046 = vmatpush1.msra.mxu0 %v1032
  %1047 = vmatprep.subr.mxu0 0.0
  %1048 = vmatpush1.msra.mxu0 %v1033
  %1049 = vmatprep.subr.mxu0 0.0
  %1050 = vmatpush1.msra.mxu0 %v1034
  %1051 = vmatprep.subr.mxu0 0.0
  %1052 = vmatpush1.msra.mxu0 0.0
  %1053 = vmatprep.subr.mxu0 0.0
  %1054 = vmatpush1.msra.mxu0 0.0
  %1055 = vmatprep.subr.mxu0 0.0
  %1056 = vmatpush1.msra.mxu0 0.0
  %1057 = vmatprep.subr.mxu0 0.0
  %1058 = vmatpush1.msra.mxu0 0.0
  %1059 = vmatprep.subr.mxu0 0.0
  %1060 = vmatpush1.msra.mxu0 0.0
  %1061 = vmatprep.subr.mxu0 0.0
  %1062 = vmatpush1.msra.mxu0 0.0
  %1063 = vmatprep.subr.mxu0 0.0
  %1064 = vmatpush1.msra.mxu0 0.0
  %1065 = vmatprep.subr.mxu0 0.0
  %1066 = vmatpush1.msra.mxu0 0.0
  %1067 = vmatprep.subr.mxu0 0.0
  %1068 = vmatpush1.msra.mxu0 0.0
  %1069 = vmatprep.subr.mxu0 0.0
  %1070 = vmatpush1.msra.mxu0 0.0
  %1071 = vmatprep.subr.mxu0 0.0
  %1072 = vmatpush1.msra.mxu0 0.0
  %1073 = vmatprep.subr.mxu0 0.0
  %1074 = vmatpush1.msra.mxu0 0.0
  %1075 = vmatprep.subr.mxu0 0.0
  %1076 = vmatpush1.msra.mxu0 0.0
  %1077 = vmatprep.subr.mxu0 0.0
  %1078 = vmatpush1.msra.mxu0 0.0
  %1079 = vmatprep.subr.mxu0 0.0
  %1080 = vmatpush1.msra.mxu0 0.0
  %1081 = vmatprep.subr.mxu0 0.0
  %1082 = vmatpush1.msra.mxu0 0.0
  %1083 = vmatprep.subr.mxu0 0.0
  %1084 = vmatpush1.msra.mxu0 0.0
  %1085 = vmatprep.subr.mxu0 0.0
  %1086 = vmatpush1.msra.mxu0 0.0
  %1087 = vmatprep.subr.mxu0 0.0
  %1088 = vmatpush1.msra.mxu0 0.0
  %1089 = vmatprep.subr.mxu0 0.0
  %1090 = vmatpush1.msra.mxu0 0.0
  %1091 = vmatprep.subr.mxu0 0.0
  %1092 = vmatpush1.msra.mxu0 0.0
  %1093 = vmatprep.subr.mxu0 0.0
  %1094 = vmatpush1.msra.mxu0 0.0
  %1095 = vmatprep.subr.mxu0 0.0
  %1096 = vmatpush1.msra.mxu0 0.0
  %1097 = vmatprep.subr.mxu0 0.0
  %1098 = vmatpush1.msra.mxu0 0.0
  %1099 = vmatprep.mubr.f32.mxu0 0.0
  %1100 = vmatmul.mubr.f32.gmra.mrb[0].mxu0 %v737
  %v1101 = vpop.f32.mrb[0].mxu0
  %v1102 = vadd.f32 0.0, %v1101
  %v1103 = vpop.f32.mrb[0].mxu0
  %1104 = vdwg.mxu0
  %v1105 = vsel %vm433, %v733, 0.0
  %1106 = vadd.xlane.f32.xlu0 %v1105
  %v1107 = vpop.xlane.xlu0 %1106
  %v1108 = vrot.slane %v1107, 4
  %v1109 = vadd.f32 %v1107, %v1108
  %v1110 = vrot.slane %v1109, 2
  %v1111 = vadd.f32 %v1109, %v1110
  %v1112 = vrot.slane %v1111, 1
  %v1113 = vadd.f32 %v1111, %v1112
  %s1114 = vtos %v1113
  %s1115 = smax.f32 %s1114, 1.0
  %v1116 = vmul.f32 %v1102, %v735
  %v1117 = vsel %vm433, %v1116, 0.0
  %1118 = vadd.xlane.f32.xlu0 %v1117
  %v1119 = vpop.xlane.xlu0 %1118
  %v1120 = vrot.slane %v1119, 4
  %v1121 = vadd.f32 %v1119, %v1120
  %v1122 = vrot.slane %v1121, 2
  %v1123 = vadd.f32 %v1121, %v1122
  %v1124 = vrot.slane %v1123, 1
  %v1125 = vadd.f32 %v1123, %v1124
  %s1126 = vtos %v1125
  %v1127 = vstv %s1115
  %v1128 = vrcp.pop %v1127
  %s1129 = vtos %v1128
  %s1130 = smul.f32 %s1126, %s1129
  %v1131 = vsub.f32 1.0, %v733
  %v1132 = vmul.f32 %v1131, %v22
  %v1133 = vadd.f32 %v809, %v1132
  %v1135 = vcombine.high %v1133, %v1133
  %v1137 = vunpack.c.l.s4 1966171168
  %v1138 = vunpack.c.0.s8 %v1137
  %v1139 = vlaneseq
  %v1140 = vshrl.u32 %v1139, 7
  %v1141 = vsub.s32 %v1138, %v1140
  %v1142 = vrot.slane %v1133, %v1141
  %v1144 = vunpack.c.l.s4 1966171168
  %v1145 = vunpack.c.0.s8 %v1144
  %v1146 = vlaneseq
  %v1147 = vshrl.u32 %v1146, 7
  %v1148 = vsub.s32 %v1145, %v1147
  %v1149 = vrot.slane %v1135, %v1148
  %v1150 = vcombine.high %v1142, %v1142
  %v1151 = vcombine.high %v1149, %v1149
  %v1153 = vunpack.c.l.s4 1966171168
  %v1154 = vunpack.c.0.s8 %v1153
  %v1155 = vlaneseq
  %v1156 = vshrl.u32 %v1155, 7
  %v1157 = vsub.s32 %v1154, %v1156
  %v1158 = vrot.slane %v1142, %v1157
  %v1160 = vunpack.c.l.s4 1966171168
  %v1161 = vunpack.c.0.s8 %v1160
  %v1162 = vlaneseq
  %v1163 = vshrl.u32 %v1162, 7
  %v1164 = vsub.s32 %v1161, %v1163
  %v1165 = vrot.slane %v1149, %v1164
  %v1167 = vunpack.c.l.s4 1966171168
  %v1168 = vunpack.c.0.s8 %v1167
  %v1169 = vlaneseq
  %v1170 = vshrl.u32 %v1169, 7
  %v1171 = vsub.s32 %v1168, %v1170
  %v1172 = vrot.slane %v1150, %v1171
  %v1174 = vunpack.c.l.s4 1966171168
  %v1175 = vunpack.c.0.s8 %v1174
  %v1176 = vlaneseq
  %v1177 = vshrl.u32 %v1176, 7
  %v1178 = vsub.s32 %v1175, %v1177
  %v1179 = vrot.slane %v1151, %v1178
  %v1180 = vcombine.high %v1158, %v1158
  %v1181 = vcombine.high %v1165, %v1165
  %v1182 = vcombine.high %v1172, %v1172
  %v1183 = vcombine.high %v1179, %v1179
  %v1184 = vlaneseq
  %v1185 = vshrl.u32 %v1184, 7
  %v1186 = vsub.s32 0, %v1185
  %v1187 = vrot.slane %v1158, %v1186
  %v1188 = vlaneseq
  %v1189 = vshrl.u32 %v1188, 7
  %v1190 = vsub.s32 0, %v1189
  %v1191 = vrot.slane %v1172, %v1190
  %v1192 = vlaneseq
  %v1193 = vshrl.u32 %v1192, 7
  %v1194 = vsub.s32 0, %v1193
  %v1195 = vrot.slane %v1180, %v1194
  %v1196 = vlaneseq
  %v1197 = vshrl.u32 %v1196, 7
  %v1198 = vsub.s32 0, %v1197
  %v1199 = vrot.slane %v1182, %v1198
  %v1200 = vlaneseq
  %v1201 = vshrl.u32 %v1200, 7
  %v1202 = vsub.s32 0, %v1201
  %v1203 = vrot.slane %v1165, %v1202
  %v1204 = vlaneseq
  %v1205 = vshrl.u32 %v1204, 7
  %v1206 = vsub.s32 0, %v1205
  %v1207 = vrot.slane %v1179, %v1206
  %v1208 = vlaneseq
  %v1209 = vshrl.u32 %v1208, 7
  %v1210 = vsub.s32 0, %v1209
  %v1211 = vrot.slane %v1181, %v1210
  %v1212 = vlaneseq
  %v1213 = vshrl.u32 %v1212, 7
  %v1214 = vsub.s32 0, %v1213
  %v1215 = vrot.slane %v1183, %v1214
  %v1224 = vsub.f32 %v1187, %v1133
  %v1225 = vsub.f32 %v1191, %v1133
  %v1226 = vsub.f32 %v1195, %v1133
  %v1227 = vsub.f32 %v1199, %v1133
  %v1228 = vsub.f32 %v1203, %v1133
  %v1229 = vsub.f32 %v1207, %v1133
  %v1230 = vsub.f32 %v1211, %v1133
  %v1231 = vsub.f32 %v1215, %v1133
  %v1232 = vand.u32 2147483647, %v1224
  %v1233 = vand.u32 2147483647, %v1225
  %v1234 = vand.u32 2147483647, %v1226
  %v1235 = vand.u32 2147483647, %v1227
  %v1236 = vand.u32 2147483647, %v1228
  %v1237 = vand.u32 2147483647, %v1229
  %v1238 = vand.u32 2147483647, %v1230
  %v1239 = vand.u32 2147483647, %v1231
  %v1240 = vsel %vm314, %v1232, 0.0
  %1241 = vadd.xlane.f32.xlu0 %v1240
  %v1242 = vpop.xlane.xlu0 %1241
  %v1243 = vsel %vm314, %v1233, 0.0
  %1244 = vadd.xlane.f32.xlu0 %v1243
  %v1245 = vpop.xlane.xlu0 %1244
  %v1246 = vsel %vm314, %v1234, 0.0
  %1247 = vadd.xlane.f32.xlu0 %v1246
  %v1248 = vpop.xlane.xlu0 %1247
  %v1249 = vsel %vm314, %v1235, 0.0
  %1250 = vadd.xlane.f32.xlu0 %v1249
  %v1251 = vpop.xlane.xlu0 %1250
  %v1252 = vsel %vm314, %v1236, 0.0
  %1253 = vadd.xlane.f32.xlu0 %v1252
  %v1254 = vpop.xlane.xlu0 %1253
  %v1255 = vsel %vm314, %v1237, 0.0
  %1256 = vadd.xlane.f32.xlu0 %v1255
  %v1257 = vpop.xlane.xlu0 %1256
  %v1258 = vsel %vm314, %v1238, 0.0
  %1259 = vadd.xlane.f32.xlu0 %v1258
  %v1260 = vpop.xlane.xlu0 %1259
  %v1261 = vsel %vm314, %v1239, 0.0
  %1262 = vadd.xlane.f32.xlu0 %v1261
  %v1263 = vpop.xlane.xlu0 %1262
  %v1272 = vlaneseq
  %v1273 = vshrl.u32 %v1272, 7
  %v1274 = vsub.s32 %v15, %v1273
  %v1275 = vrot.slane %v1242, %v1274
  %v1276 = vlaneseq
  %v1277 = vshrl.u32 %v1276, 7
  %v1278 = vsub.s32 %v15, %v1277
  %v1279 = vrot.slane %v1245, %v1278
  %v1280 = vlaneseq
  %v1281 = vshrl.u32 %v1280, 7
  %v1282 = vsub.s32 %v15, %v1281
  %v1283 = vrot.slane %v1248, %v1282
  %v1284 = vlaneseq
  %v1285 = vshrl.u32 %v1284, 7
  %v1286 = vsub.s32 %v15, %v1285
  %v1287 = vrot.slane %v1251, %v1286
  %v1288 = vlaneseq
  %v1289 = vshrl.u32 %v1288, 7
  %v1290 = vsub.s32 %v15, %v1289
  %v1291 = vrot.slane %v1254, %v1290
  %v1292 = vlaneseq
  %v1293 = vshrl.u32 %v1292, 7
  %v1294 = vsub.s32 %v15, %v1293
  %v1295 = vrot.slane %v1257, %v1294
  %v1296 = vlaneseq
  %v1297 = vshrl.u32 %v1296, 7
  %v1298 = vsub.s32 %v15, %v1297
  %v1299 = vrot.slane %v1260, %v1298
  %v1300 = vlaneseq
  %v1301 = vshrl.u32 %v1300, 7
  %v1302 = vsub.s32 %v15, %v1301
  %v1303 = vrot.slane %v1263, %v1302
  %v1304 = vsel %vm633, %v1279, %v1275
  %v1305 = vsel %vm635, %v1283, %v1304
  %v1306 = vsel %vm637, %v1287, %v1305
  %v1307 = vsel %vm639, %v1291, %v1306
  %v1308 = vsel %vm641, %v1295, %v1307
  %v1309 = vsel %vm643, %v1299, %v1308
  %v1310 = vsel %vm645, %v1303, %v1309
  %v1312 = vsub.f32 %v19, %v1310
  %v1313 = vmax.f32 %v1312, 0.0
  %v1314 = vmul.f32 %v1313, %v1313
  %v1315 = vsel %vm168, %v1314, 0.0
  %1316 = vadd.xlane.f32.xlu0 %v1315
  %v1317 = vpop.xlane.xlu0 %1316
  %v1318 = vrot.slane %v1317, 4
  %v1319 = vadd.f32 %v1317, %v1318
  %v1320 = vrot.slane %v1319, 2
  %v1321 = vadd.f32 %v1319, %v1320
  %v1322 = vrot.slane %v1321, 1
  %v1323 = vadd.f32 %v1321, %v1322
  %s1324 = vtos %v1323
  %s1325 = smul.f32 %s1114, 2.0
  %s1326 = ssub.f32 %s1114, 1.0
  %s1327 = sadd.f32 %s1326, 1e-10
  %s1328 = smul.f32 %s1325, %s1327
  %p1329 = scmp.gt.f32.partialorder %s1114, 0.5
  %s1330 = sadd.f32 %s1324, 1e-10
  %s1331 = scalar_select %p1329, %s1328, 1.0
  %v1332 = vstv %s1331
  %v1333 = vrcp.pop %v1332
  %s1334 = vtos %v1333
  %s1335 = smul.f32 %s1330, %s1334
  %s1336 = scalar_select %p1329, %s1335, 0.0
  %v1337 = vand.u32 2147483647, %v809
  %v1338 = vsel %vm314, %v1337, 0.0
  %1339 = vadd.xlane.f32.xlu0 %v1338
  %v1340 = vpop.xlane.xlu0 %1339
  %v1341 = vrot.slane %v1340, 4
  %v1342 = vadd.f32 %v1340, %v1341
  %v1343 = vrot.slane %v1342, 2
  %v1344 = vadd.f32 %v1342, %v1343
  %v1345 = vrot.slane %v1344, 1
  %v1346 = vadd.f32 %v1344, %v1345
  %s1347 = vtos %v1346
  %v1348 = vstv %s1115
  %v1349 = vrcp.pop %v1348
  %s1350 = vtos %v1349
  %s1351 = smul.f32 %s1347, %s1350
  %s1352 = sadd.f32 %s1130, %s1336
  %s1353 = smul.f32 %s1351, 0.001
  %s1354 = sadd.f32 %s1352, %s1353
  %v1355 = vstv %s1354
  %1356 = vst.msk [vmem:[%s2 + $0x1] sm:$0x1] %vm692, %v1355
  %v1357 = vstv %s727
  %1358 = vst.msk [vmem:[%s2 + $0x1] sm:$0x1] %vm695, %v1357
  %s1359 = scalar_lea.vmem %s0, 128
  %v1360 = vld [vmem:[%s1359] sm:$0xff]
  %v1361 = vld [vmem:[%s1359 + $0x8] sm:$0xff]
  %v1362 = vld [vmem:[%s1359 + $0x10] sm:$0xff]
  %v1363 = vld [vmem:[%s1359 + $0x18] sm:$0xff]
  %v1364 = vld [vmem:[%s1359 + $0x20] sm:$0xff]
  %v1365 = vld [vmem:[%s1359 + $0x28] sm:$0xff]
  %v1366 = vld [vmem:[%s1359 + $0x30] sm:$0xff]
  %v1367 = vld [vmem:[%s1359 + $0x38] sm:$0xff]
  %s1368 = scalar_lea.vmem %s1, 2
  %v1369 = vld [vmem:[%s1368] sm:$0x1]
  %v1370 = vlaneseq
  %v1371 = vshrl.u32 %v1370, 7
  %v1372 = vsub.s32 0, %v1371
  %v1373 = vrot.slane %v1369, %v1372
  %vm1374 = vcmp.eq.s32.totalorder %v13, %v1373
  %v1375 = vsel %vm1374, 1, 0
  %v1376 = vcvt.s32.f32 %v1375
  %vm1377 = vcmp.gt.s32.totalorder %v1369, 0
  %v1378 = vsel %vm1377, 1, 0
  %v1379 = vcvt.s32.f32 %v1378
  %v1380 = vsel %vm42, %v1379, 0.0
  %1381 = vadd.xlane.f32.xlu0 %v1380
  %v1382 = vpop.xlane.xlu0 %1381
  %v1383 = vrot.slane %v1382, 4
  %v1384 = vadd.f32 %v1382, %v1383
  %v1385 = vrot.slane %v1384, 2
  %v1386 = vadd.f32 %v1384, %v1385
  %v1387 = vrot.slane %v1386, 1
  %v1388 = vadd.f32 %v1386, %v1387
  %s1389 = vtos %v1388
  %v1390 = vsel %vm53, %v1376, 0.0
  %1391 = vadd.xlane.f32.xlu0 %v1390
  %v1392 = vpop.xlane.xlu0 %1391
  %vm1393 = vcmp.gt.f32.partialorder %v1392, 0.0
  %v1394 = vsel %vm1393, 1, 0
  %v1395 = vcvt.s32.f32 %v1394
  %v1396 = vmax.f32 %v1392, 1.0
  %v1397 = vrcp.pop %v1396
  %v1399 = vsel %vm53, %v1376, 0
  %1401 = vmatprep.subr.mxu0 0.0
  %1402 = vmatpush1.msra.mxu0 %v1360
  %1403 = vmatprep.subr.mxu0 0.0
  %1404 = vmatpush1.msra.mxu0 %v1361
  %1405 = vmatprep.subr.mxu0 0.0
  %1406 = vmatpush1.msra.mxu0 %v1362
  %1407 = vmatprep.subr.mxu0 0.0
  %1408 = vmatpush1.msra.mxu0 %v1363
  %1409 = vmatprep.subr.mxu0 0.0
  %1410 = vmatpush1.msra.mxu0 %v1364
  %1411 = vmatprep.subr.mxu0 0.0
  %1412 = vmatpush1.msra.mxu0 %v1365
  %1413 = vmatprep.subr.mxu0 0.0
  %1414 = vmatpush1.msra.mxu0 %v1366
  %1415 = vmatprep.subr.mxu0 0.0
  %1416 = vmatpush1.msra.mxu0 %v1367
  %1417 = vmatprep.subr.mxu0 0.0
  %1418 = vmatpush1.msra.mxu0 0.0
  %1419 = vmatprep.subr.mxu0 0.0
  %1420 = vmatpush1.msra.mxu0 0.0
  %1421 = vmatprep.subr.mxu0 0.0
  %1422 = vmatpush1.msra.mxu0 0.0
  %1423 = vmatprep.subr.mxu0 0.0
  %1424 = vmatpush1.msra.mxu0 0.0
  %1425 = vmatprep.subr.mxu0 0.0
  %1426 = vmatpush1.msra.mxu0 0.0
  %1427 = vmatprep.subr.mxu0 0.0
  %1428 = vmatpush1.msra.mxu0 0.0
  %1429 = vmatprep.subr.mxu0 0.0
  %1430 = vmatpush1.msra.mxu0 0.0
  %1431 = vmatprep.subr.mxu0 0.0
  %1432 = vmatpush1.msra.mxu0 0.0
  %1433 = vmatprep.subr.mxu0 0.0
  %1434 = vmatpush1.msra.mxu0 0.0
  %1435 = vmatprep.subr.mxu0 0.0
  %1436 = vmatpush1.msra.mxu0 0.0
  %1437 = vmatprep.subr.mxu0 0.0
  %1438 = vmatpush1.msra.mxu0 0.0
  %1439 = vmatprep.subr.mxu0 0.0
  %1440 = vmatpush1.msra.mxu0 0.0
  %1441 = vmatprep.subr.mxu0 0.0
  %1442 = vmatpush1.msra.mxu0 0.0
  %1443 = vmatprep.subr.mxu0 0.0
  %1444 = vmatpush1.msra.mxu0 0.0
  %1445 = vmatprep.subr.mxu0 0.0
  %1446 = vmatpush1.msra.mxu0 0.0
  %1447 = vmatprep.subr.mxu0 0.0
  %1448 = vmatpush1.msra.mxu0 0.0
  %1449 = vmatprep.subr.mxu0 0.0
  %1450 = vmatpush1.msra.mxu0 0.0
  %1451 = vmatprep.subr.mxu0 0.0
  %1452 = vmatpush1.msra.mxu0 0.0
  %1453 = vmatprep.subr.mxu0 0.0
  %1454 = vmatpush1.msra.mxu0 0.0
  %1455 = vmatprep.subr.mxu0 0.0
  %1456 = vmatpush1.msra.mxu0 0.0
  %1457 = vmatprep.subr.mxu0 0.0
  %1458 = vmatpush1.msra.mxu0 0.0
  %1459 = vmatprep.subr.mxu0 0.0
  %1460 = vmatpush1.msra.mxu0 0.0
  %1461 = vmatprep.subr.mxu0 0.0
  %1462 = vmatpush1.msra.mxu0 0.0
  %1463 = vmatprep.subr.mxu0 0.0
  %1464 = vmatpush1.msra.mxu0 0.0
  %1465 = vmatprep.mubr.f32.mxu0 0.0
  %1466 = vmatmul.mubr.f32.gmra.mrb[0].mxu0 %v1399
  %v1467 = vpop.f32.mrb[0].mxu0
  %v1468 = vadd.f32 0.0, %v1467
  %v1469 = vpop.f32.mrb[0].mxu0
  %1470 = vdwg.mxu0
  %v1471 = vmul.f32 %v1468, %v1397
  %1472 = vxpose.xlu0.b32.start [1/16] %v1376, 128
  %1473 = vxpose.xlu0.b32.cont [2/16] 0.0, 128
  %1474 = vxpose.xlu0.b32.cont [3/16] 0.0, 128
  %1475 = vxpose.xlu0.b32.cont [4/16] 0.0, 128
  %1476 = vxpose.xlu0.b32.cont [5/16] 0.0, 128
  %1477 = vxpose.xlu0.b32.cont [6/16] 0.0, 128
  %1478 = vxpose.xlu0.b32.cont [7/16] 0.0, 128
  %1479 = vxpose.xlu0.b32.cont [8/16] 0.0, 128
  %1480 = vxpose.xlu0.b32.cont [9/16] 0.0, 128
  %1481 = vxpose.xlu0.b32.cont [10/16] 0.0, 128
  %1482 = vxpose.xlu0.b32.cont [11/16] 0.0, 128
  %1483 = vxpose.xlu0.b32.cont [12/16] 0.0, 128
  %1484 = vxpose.xlu0.b32.cont [13/16] 0.0, 128
  %1485 = vxpose.xlu0.b32.cont [14/16] 0.0, 128
  %1486 = vxpose.xlu0.b32.cont [15/16] 0.0, 128
  %1487 = vxpose.xlu0.b32.end [16/16] 0.0, 128
  %v1488 = vpop.trf.xlu0
  %v1489 = vpop.trf.xlu0
  %v1490 = vpop.trf.xlu0
  %v1491 = vpop.trf.xlu0
  %v1492 = vpop.trf.xlu0
  %v1493 = vpop.trf.xlu0
  %v1494 = vpop.trf.xlu0
  %v1495 = vpop.trf.xlu0
  %v1496 = vpop.trf.xlu0
  %v1497 = vpop.trf.xlu0
  %v1498 = vpop.trf.xlu0
  %v1499 = vpop.trf.xlu0
  %v1500 = vpop.trf.xlu0
  %v1501 = vpop.trf.xlu0
  %v1502 = vpop.trf.xlu0
  %v1503 = vpop.trf.xlu0
  %v1505 = vsel %vm168, %v1488, 0
  %v1508 = vsel %vm168, %v1489, 0
  %v1511 = vsel %vm168, %v1490, 0
  %v1514 = vsel %vm168, %v1491, 0
  %v1517 = vsel %vm168, %v1492, 0
  %v1520 = vsel %vm168, %v1493, 0
  %v1523 = vsel %vm168, %v1494, 0
  %v1526 = vsel %vm168, %v1495, 0
  %1528 = vmatprep.subr.mxu0 0.0
  %1529 = vmatpush1.msra.mxu0 %v1471
  %1530 = vmatprep.subr.mxu0 0.0
  %1531 = vmatpush1.msra.mxu0 0.0
  %1532 = vmatprep.subr.mxu0 0.0
  %1533 = vmatpush1.msra.mxu0 0.0
  %1534 = vmatprep.subr.mxu0 0.0
  %1535 = vmatpush1.msra.mxu0 0.0
  %1536 = vmatprep.subr.mxu0 0.0
  %1537 = vmatpush1.msra.mxu0 0.0
  %1538 = vmatprep.subr.mxu0 0.0
  %1539 = vmatpush1.msra.mxu0 0.0
  %1540 = vmatprep.subr.mxu0 0.0
  %1541 = vmatpush1.msra.mxu0 0.0
  %1542 = vmatprep.subr.mxu0 0.0
  %1543 = vmatpush1.msra.mxu0 0.0
  %1544 = vmatprep.subr.mxu0 0.0
  %1545 = vmatpush1.msra.mxu0 0.0
  %1546 = vmatprep.subr.mxu0 0.0
  %1547 = vmatpush1.msra.mxu0 0.0
  %1548 = vmatprep.subr.mxu0 0.0
  %1549 = vmatpush1.msra.mxu0 0.0
  %1550 = vmatprep.subr.mxu0 0.0
  %1551 = vmatpush1.msra.mxu0 0.0
  %1552 = vmatprep.subr.mxu0 0.0
  %1553 = vmatpush1.msra.mxu0 0.0
  %1554 = vmatprep.subr.mxu0 0.0
  %1555 = vmatpush1.msra.mxu0 0.0
  %1556 = vmatprep.subr.mxu0 0.0
  %1557 = vmatpush1.msra.mxu0 0.0
  %1558 = vmatprep.subr.mxu0 0.0
  %1559 = vmatpush1.msra.mxu0 0.0
  %1560 = vmatprep.subr.mxu0 0.0
  %1561 = vmatpush1.msra.mxu0 0.0
  %1562 = vmatprep.subr.mxu0 0.0
  %1563 = vmatpush1.msra.mxu0 0.0
  %1564 = vmatprep.subr.mxu0 0.0
  %1565 = vmatpush1.msra.mxu0 0.0
  %1566 = vmatprep.subr.mxu0 0.0
  %1567 = vmatpush1.msra.mxu0 0.0
  %1568 = vmatprep.subr.mxu0 0.0
  %1569 = vmatpush1.msra.mxu0 0.0
  %1570 = vmatprep.subr.mxu0 0.0
  %1571 = vmatpush1.msra.mxu0 0.0
  %1572 = vmatprep.subr.mxu0 0.0
  %1573 = vmatpush1.msra.mxu0 0.0
  %1574 = vmatprep.subr.mxu0 0.0
  %1575 = vmatpush1.msra.mxu0 0.0
  %1576 = vmatprep.subr.mxu0 0.0
  %1577 = vmatpush1.msra.mxu0 0.0
  %1578 = vmatprep.subr.mxu0 0.0
  %1579 = vmatpush1.msra.mxu0 0.0
  %1580 = vmatprep.subr.mxu0 0.0
  %1581 = vmatpush1.msra.mxu0 0.0
  %1582 = vmatprep.subr.mxu0 0.0
  %1583 = vmatpush1.msra.mxu0 0.0
  %1584 = vmatprep.subr.mxu0 0.0
  %1585 = vmatpush1.msra.mxu0 0.0
  %1586 = vmatprep.subr.mxu0 0.0
  %1587 = vmatpush1.msra.mxu0 0.0
  %1588 = vmatprep.subr.mxu0 0.0
  %1589 = vmatpush1.msra.mxu0 0.0
  %1590 = vmatprep.subr.mxu0 0.0
  %1591 = vmatpush1.msra.mxu0 0.0
  %1592 = vmatprep.mubr.f32.mxu0 0.0
  %1593 = vmatmul.mubr.f32.gmra.mrb[0].mxu0 %v1505
  %v1594 = vpop.f32.mrb[0].mxu0
  %v1595 = vadd.f32 0.0, %v1594
  %v1596 = vpop.f32.mrb[0].mxu0
  %1597 = vmatprep.mubr.f32.mxu0 0.0
  %1598 = vmatmul.mubr.f32.gmra.mrb[0].mxu0 %v1508
  %v1599 = vpop.f32.mrb[0].mxu0
  %v1600 = vadd.f32 0.0, %v1599
  %v1601 = vpop.f32.mrb[0].mxu0
  %1602 = vmatprep.mubr.f32.mxu0 0.0
  %1603 = vmatmul.mubr.f32.gmra.mrb[0].mxu0 %v1511
  %v1604 = vpop.f32.mrb[0].mxu0
  %v1605 = vadd.f32 0.0, %v1604
  %v1606 = vpop.f32.mrb[0].mxu0
  %1607 = vmatprep.mubr.f32.mxu0 0.0
  %1608 = vmatmul.mubr.f32.gmra.mrb[0].mxu0 %v1514
  %v1609 = vpop.f32.mrb[0].mxu0
  %v1610 = vadd.f32 0.0, %v1609
  %v1611 = vpop.f32.mrb[0].mxu0
  %1612 = vmatprep.mubr.f32.mxu0 0.0
  %1613 = vmatmul.mubr.f32.gmra.mrb[0].mxu0 %v1517
  %v1614 = vpop.f32.mrb[0].mxu0
  %v1615 = vadd.f32 0.0, %v1614
  %v1616 = vpop.f32.mrb[0].mxu0
  %1617 = vmatprep.mubr.f32.mxu0 0.0
  %1618 = vmatmul.mubr.f32.gmra.mrb[0].mxu0 %v1520
  %v1619 = vpop.f32.mrb[0].mxu0
  %v1620 = vadd.f32 0.0, %v1619
  %v1621 = vpop.f32.mrb[0].mxu0
  %1622 = vmatprep.mubr.f32.mxu0 0.0
  %1623 = vmatmul.mubr.f32.gmra.mrb[0].mxu0 %v1523
  %v1624 = vpop.f32.mrb[0].mxu0
  %v1625 = vadd.f32 0.0, %v1624
  %v1626 = vpop.f32.mrb[0].mxu0
  %1627 = vmatprep.mubr.f32.mxu0 0.0
  %1628 = vmatmul.mubr.f32.gmra.mrb[0].mxu0 %v1526
  %v1629 = vpop.f32.mrb[0].mxu0
  %v1630 = vadd.f32 0.0, %v1629
  %v1631 = vpop.f32.mrb[0].mxu0
  %1632 = vdwg.mxu0
  %v1633 = vsub.f32 %v1360, %v1595
  %v1634 = vsub.f32 %v1361, %v1600
  %v1635 = vsub.f32 %v1362, %v1605
  %v1636 = vsub.f32 %v1363, %v1610
  %v1637 = vsub.f32 %v1364, %v1615
  %v1638 = vsub.f32 %v1365, %v1620
  %v1639 = vsub.f32 %v1366, %v1625
  %v1640 = vsub.f32 %v1367, %v1630
  %v1641 = vand.u32 2147483647, %v1633
  %v1642 = vand.u32 2147483647, %v1634
  %v1643 = vand.u32 2147483647, %v1635
  %v1644 = vand.u32 2147483647, %v1636
  %v1645 = vand.u32 2147483647, %v1637
  %v1646 = vand.u32 2147483647, %v1638
  %v1647 = vand.u32 2147483647, %v1639
  %v1648 = vand.u32 2147483647, %v1640
  %v1649 = vsel %vm314, %v1641, 0.0
  %1650 = vadd.xlane.f32.xlu0 %v1649
  %v1651 = vpop.xlane.xlu0 %1650
  %v1652 = vsel %vm314, %v1642, 0.0
  %1653 = vadd.xlane.f32.xlu0 %v1652
  %v1654 = vpop.xlane.xlu0 %1653
  %v1655 = vsel %vm314, %v1643, 0.0
  %1656 = vadd.xlane.f32.xlu0 %v1655
  %v1657 = vpop.xlane.xlu0 %1656
  %v1658 = vsel %vm314, %v1644, 0.0
  %1659 = vadd.xlane.f32.xlu0 %v1658
  %v1660 = vpop.xlane.xlu0 %1659
  %v1661 = vsel %vm314, %v1645, 0.0
  %1662 = vadd.xlane.f32.xlu0 %v1661
  %v1663 = vpop.xlane.xlu0 %1662
  %v1664 = vsel %vm314, %v1646, 0.0
  %1665 = vadd.xlane.f32.xlu0 %v1664
  %v1666 = vpop.xlane.xlu0 %1665
  %v1667 = vsel %vm314, %v1647, 0.0
  %1668 = vadd.xlane.f32.xlu0 %v1667
  %v1669 = vpop.xlane.xlu0 %1668
  %v1670 = vsel %vm314, %v1648, 0.0
  %1671 = vadd.xlane.f32.xlu0 %v1670
  %v1672 = vpop.xlane.xlu0 %1671
  %v1673 = vsub.f32 %v1651, 0.5
  %v1674 = vsub.f32 %v1654, 0.5
  %v1675 = vsub.f32 %v1657, 0.5
  %v1676 = vsub.f32 %v1660, 0.5
  %v1677 = vsub.f32 %v1663, 0.5
  %v1678 = vsub.f32 %v1666, 0.5
  %v1679 = vsub.f32 %v1669, 0.5
  %v1680 = vsub.f32 %v1672, 0.5
  %v1681 = vmax.f32 %v1673, 0.0
  %v1682 = vmax.f32 %v1674, 0.0
  %v1683 = vmax.f32 %v1675, 0.0
  %v1684 = vmax.f32 %v1676, 0.0
  %v1685 = vmax.f32 %v1677, 0.0
  %v1686 = vmax.f32 %v1678, 0.0
  %v1687 = vmax.f32 %v1679, 0.0
  %v1688 = vmax.f32 %v1680, 0.0
  %v1689 = vmul.f32 %v1681, %v1681
  %v1690 = vmul.f32 %v1682, %v1682
  %v1691 = vmul.f32 %v1683, %v1683
  %v1692 = vmul.f32 %v1684, %v1684
  %v1693 = vmul.f32 %v1685, %v1685
  %v1694 = vmul.f32 %v1686, %v1686
  %v1695 = vmul.f32 %v1687, %v1687
  %v1696 = vmul.f32 %v1688, %v1688
  %1697 = vmatprep.subr.mxu0 0.0
  %1698 = vmatpush1.msra.mxu0 %v1689
  %1699 = vmatprep.subr.mxu0 0.0
  %1700 = vmatpush1.msra.mxu0 %v1690
  %1701 = vmatprep.subr.mxu0 0.0
  %1702 = vmatpush1.msra.mxu0 %v1691
  %1703 = vmatprep.subr.mxu0 0.0
  %1704 = vmatpush1.msra.mxu0 %v1692
  %1705 = vmatprep.subr.mxu0 0.0
  %1706 = vmatpush1.msra.mxu0 %v1693
  %1707 = vmatprep.subr.mxu0 0.0
  %1708 = vmatpush1.msra.mxu0 %v1694
  %1709 = vmatprep.subr.mxu0 0.0
  %1710 = vmatpush1.msra.mxu0 %v1695
  %1711 = vmatprep.subr.mxu0 0.0
  %1712 = vmatpush1.msra.mxu0 %v1696
  %1713 = vmatprep.subr.mxu0 0.0
  %1714 = vmatpush1.msra.mxu0 0.0
  %1715 = vmatprep.subr.mxu0 0.0
  %1716 = vmatpush1.msra.mxu0 0.0
  %1717 = vmatprep.subr.mxu0 0.0
  %1718 = vmatpush1.msra.mxu0 0.0
  %1719 = vmatprep.subr.mxu0 0.0
  %1720 = vmatpush1.msra.mxu0 0.0
  %1721 = vmatprep.subr.mxu0 0.0
  %1722 = vmatpush1.msra.mxu0 0.0
  %1723 = vmatprep.subr.mxu0 0.0
  %1724 = vmatpush1.msra.mxu0 0.0
  %1725 = vmatprep.subr.mxu0 0.0
  %1726 = vmatpush1.msra.mxu0 0.0
  %1727 = vmatprep.subr.mxu0 0.0
  %1728 = vmatpush1.msra.mxu0 0.0
  %1729 = vmatprep.subr.mxu0 0.0
  %1730 = vmatpush1.msra.mxu0 0.0
  %1731 = vmatprep.subr.mxu0 0.0
  %1732 = vmatpush1.msra.mxu0 0.0
  %1733 = vmatprep.subr.mxu0 0.0
  %1734 = vmatpush1.msra.mxu0 0.0
  %1735 = vmatprep.subr.mxu0 0.0
  %1736 = vmatpush1.msra.mxu0 0.0
  %1737 = vmatprep.subr.mxu0 0.0
  %1738 = vmatpush1.msra.mxu0 0.0
  %1739 = vmatprep.subr.mxu0 0.0
  %1740 = vmatpush1.msra.mxu0 0.0
  %1741 = vmatprep.subr.mxu0 0.0
  %1742 = vmatpush1.msra.mxu0 0.0
  %1743 = vmatprep.subr.mxu0 0.0
  %1744 = vmatpush1.msra.mxu0 0.0
  %1745 = vmatprep.subr.mxu0 0.0
  %1746 = vmatpush1.msra.mxu0 0.0
  %1747 = vmatprep.subr.mxu0 0.0
  %1748 = vmatpush1.msra.mxu0 0.0
  %1749 = vmatprep.subr.mxu0 0.0
  %1750 = vmatpush1.msra.mxu0 0.0
  %1751 = vmatprep.subr.mxu0 0.0
  %1752 = vmatpush1.msra.mxu0 0.0
  %1753 = vmatprep.subr.mxu0 0.0
  %1754 = vmatpush1.msra.mxu0 0.0
  %1755 = vmatprep.subr.mxu0 0.0
  %1756 = vmatpush1.msra.mxu0 0.0
  %1757 = vmatprep.subr.mxu0 0.0
  %1758 = vmatpush1.msra.mxu0 0.0
  %1759 = vmatprep.subr.mxu0 0.0
  %1760 = vmatpush1.msra.mxu0 0.0
  %1761 = vmatprep.mubr.f32.mxu0 0.0
  %1762 = vmatmul.mubr.f32.gmra.mrb[0].mxu0 %v1399
  %v1763 = vpop.f32.mrb[0].mxu0
  %v1764 = vadd.f32 0.0, %v1763
  %v1765 = vpop.f32.mrb[0].mxu0
  %1766 = vdwg.mxu0
  %v1767 = vsel %vm433, %v1395, 0.0
  %1768 = vadd.xlane.f32.xlu0 %v1767
  %v1769 = vpop.xlane.xlu0 %1768
  %v1770 = vrot.slane %v1769, 4
  %v1771 = vadd.f32 %v1769, %v1770
  %v1772 = vrot.slane %v1771, 2
  %v1773 = vadd.f32 %v1771, %v1772
  %v1774 = vrot.slane %v1773, 1
  %v1775 = vadd.f32 %v1773, %v1774
  %s1776 = vtos %v1775
  %s1777 = smax.f32 %s1776, 1.0
  %v1778 = vmul.f32 %v1764, %v1397
  %v1779 = vsel %vm433, %v1778, 0.0
  %1780 = vadd.xlane.f32.xlu0 %v1779
  %v1781 = vpop.xlane.xlu0 %1780
  %v1782 = vrot.slane %v1781, 4
  %v1783 = vadd.f32 %v1781, %v1782
  %v1784 = vrot.slane %v1783, 2
  %v1785 = vadd.f32 %v1783, %v1784
  %v1786 = vrot.slane %v1785, 1
  %v1787 = vadd.f32 %v1785, %v1786
  %s1788 = vtos %v1787
  %v1789 = vstv %s1777
  %v1790 = vrcp.pop %v1789
  %s1791 = vtos %v1790
  %s1792 = smul.f32 %s1788, %s1791
  %v1793 = vsub.f32 1.0, %v1395
  %v1794 = vmul.f32 %v1793, %v22
  %v1795 = vadd.f32 %v1471, %v1794
  %v1797 = vcombine.high %v1795, %v1795
  %v1799 = vunpack.c.l.s4 1966171168
  %v1800 = vunpack.c.0.s8 %v1799
  %v1801 = vlaneseq
  %v1802 = vshrl.u32 %v1801, 7
  %v1803 = vsub.s32 %v1800, %v1802
  %v1804 = vrot.slane %v1795, %v1803
  %v1806 = vunpack.c.l.s4 1966171168
  %v1807 = vunpack.c.0.s8 %v1806
  %v1808 = vlaneseq
  %v1809 = vshrl.u32 %v1808, 7
  %v1810 = vsub.s32 %v1807, %v1809
  %v1811 = vrot.slane %v1797, %v1810
  %v1812 = vcombine.high %v1804, %v1804
  %v1813 = vcombine.high %v1811, %v1811
  %v1815 = vunpack.c.l.s4 1966171168
  %v1816 = vunpack.c.0.s8 %v1815
  %v1817 = vlaneseq
  %v1818 = vshrl.u32 %v1817, 7
  %v1819 = vsub.s32 %v1816, %v1818
  %v1820 = vrot.slane %v1804, %v1819
  %v1822 = vunpack.c.l.s4 1966171168
  %v1823 = vunpack.c.0.s8 %v1822
  %v1824 = vlaneseq
  %v1825 = vshrl.u32 %v1824, 7
  %v1826 = vsub.s32 %v1823, %v1825
  %v1827 = vrot.slane %v1811, %v1826
  %v1829 = vunpack.c.l.s4 1966171168
  %v1830 = vunpack.c.0.s8 %v1829
  %v1831 = vlaneseq
  %v1832 = vshrl.u32 %v1831, 7
  %v1833 = vsub.s32 %v1830, %v1832
  %v1834 = vrot.slane %v1812, %v1833
  %v1836 = vunpack.c.l.s4 1966171168
  %v1837 = vunpack.c.0.s8 %v1836
  %v1838 = vlaneseq
  %v1839 = vshrl.u32 %v1838, 7
  %v1840 = vsub.s32 %v1837, %v1839
  %v1841 = vrot.slane %v1813, %v1840
  %v1842 = vcombine.high %v1820, %v1820
  %v1843 = vcombine.high %v1827, %v1827
  %v1844 = vcombine.high %v1834, %v1834
  %v1845 = vcombine.high %v1841, %v1841
  %v1846 = vlaneseq
  %v1847 = vshrl.u32 %v1846, 7
  %v1848 = vsub.s32 0, %v1847
  %v1849 = vrot.slane %v1820, %v1848
  %v1850 = vlaneseq
  %v1851 = vshrl.u32 %v1850, 7
  %v1852 = vsub.s32 0, %v1851
  %v1853 = vrot.slane %v1834, %v1852
  %v1854 = vlaneseq
  %v1855 = vshrl.u32 %v1854, 7
  %v1856 = vsub.s32 0, %v1855
  %v1857 = vrot.slane %v1842, %v1856
  %v1858 = vlaneseq
  %v1859 = vshrl.u32 %v1858, 7
  %v1860 = vsub.s32 0, %v1859
  %v1861 = vrot.slane %v1844, %v1860
  %v1862 = vlaneseq
  %v1863 = vshrl.u32 %v1862, 7
  %v1864 = vsub.s32 0, %v1863
  %v1865 = vrot.slane %v1827, %v1864
  %v1866 = vlaneseq
  %v1867 = vshrl.u32 %v1866, 7
  %v1868 = vsub.s32 0, %v1867
  %v1869 = vrot.slane %v1841, %v1868
  %v1870 = vlaneseq
  %v1871 = vshrl.u32 %v1870, 7
  %v1872 = vsub.s32 0, %v1871
  %v1873 = vrot.slane %v1843, %v1872
  %v1874 = vlaneseq
  %v1875 = vshrl.u32 %v1874, 7
  %v1876 = vsub.s32 0, %v1875
  %v1877 = vrot.slane %v1845, %v1876
  %v1886 = vsub.f32 %v1849, %v1795
  %v1887 = vsub.f32 %v1853, %v1795
  %v1888 = vsub.f32 %v1857, %v1795
  %v1889 = vsub.f32 %v1861, %v1795
  %v1890 = vsub.f32 %v1865, %v1795
  %v1891 = vsub.f32 %v1869, %v1795
  %v1892 = vsub.f32 %v1873, %v1795
  %v1893 = vsub.f32 %v1877, %v1795
  %v1894 = vand.u32 2147483647, %v1886
  %v1895 = vand.u32 2147483647, %v1887
  %v1896 = vand.u32 2147483647, %v1888
  %v1897 = vand.u32 2147483647, %v1889
  %v1898 = vand.u32 2147483647, %v1890
  %v1899 = vand.u32 2147483647, %v1891
  %v1900 = vand.u32 2147483647, %v1892
  %v1901 = vand.u32 2147483647, %v1893
  %v1902 = vsel %vm314, %v1894, 0.0
  %1903 = vadd.xlane.f32.xlu0 %v1902
  %v1904 = vpop.xlane.xlu0 %1903
  %v1905 = vsel %vm314, %v1895, 0.0
  %1906 = vadd.xlane.f32.xlu0 %v1905
  %v1907 = vpop.xlane.xlu0 %1906
  %v1908 = vsel %vm314, %v1896, 0.0
  %1909 = vadd.xlane.f32.xlu0 %v1908
  %v1910 = vpop.xlane.xlu0 %1909
  %v1911 = vsel %vm314, %v1897, 0.0
  %1912 = vadd.xlane.f32.xlu0 %v1911
  %v1913 = vpop.xlane.xlu0 %1912
  %v1914 = vsel %vm314, %v1898, 0.0
  %1915 = vadd.xlane.f32.xlu0 %v1914
  %v1916 = vpop.xlane.xlu0 %1915
  %v1917 = vsel %vm314, %v1899, 0.0
  %1918 = vadd.xlane.f32.xlu0 %v1917
  %v1919 = vpop.xlane.xlu0 %1918
  %v1920 = vsel %vm314, %v1900, 0.0
  %1921 = vadd.xlane.f32.xlu0 %v1920
  %v1922 = vpop.xlane.xlu0 %1921
  %v1923 = vsel %vm314, %v1901, 0.0
  %1924 = vadd.xlane.f32.xlu0 %v1923
  %v1925 = vpop.xlane.xlu0 %1924
  %v1934 = vlaneseq
  %v1935 = vshrl.u32 %v1934, 7
  %v1936 = vsub.s32 %v15, %v1935
  %v1937 = vrot.slane %v1904, %v1936
  %v1938 = vlaneseq
  %v1939 = vshrl.u32 %v1938, 7
  %v1940 = vsub.s32 %v15, %v1939
  %v1941 = vrot.slane %v1907, %v1940
  %v1942 = vlaneseq
  %v1943 = vshrl.u32 %v1942, 7
  %v1944 = vsub.s32 %v15, %v1943
  %v1945 = vrot.slane %v1910, %v1944
  %v1946 = vlaneseq
  %v1947 = vshrl.u32 %v1946, 7
  %v1948 = vsub.s32 %v15, %v1947
  %v1949 = vrot.slane %v1913, %v1948
  %v1950 = vlaneseq
  %v1951 = vshrl.u32 %v1950, 7
  %v1952 = vsub.s32 %v15, %v1951
  %v1953 = vrot.slane %v1916, %v1952
  %v1954 = vlaneseq
  %v1955 = vshrl.u32 %v1954, 7
  %v1956 = vsub.s32 %v15, %v1955
  %v1957 = vrot.slane %v1919, %v1956
  %v1958 = vlaneseq
  %v1959 = vshrl.u32 %v1958, 7
  %v1960 = vsub.s32 %v15, %v1959
  %v1961 = vrot.slane %v1922, %v1960
  %v1962 = vlaneseq
  %v1963 = vshrl.u32 %v1962, 7
  %v1964 = vsub.s32 %v15, %v1963
  %v1965 = vrot.slane %v1925, %v1964
  %v1966 = vsel %vm633, %v1941, %v1937
  %v1967 = vsel %vm635, %v1945, %v1966
  %v1968 = vsel %vm637, %v1949, %v1967
  %v1969 = vsel %vm639, %v1953, %v1968
  %v1970 = vsel %vm641, %v1957, %v1969
  %v1971 = vsel %vm643, %v1961, %v1970
  %v1972 = vsel %vm645, %v1965, %v1971
  %v1974 = vsub.f32 %v19, %v1972
  %v1975 = vmax.f32 %v1974, 0.0
  %v1976 = vmul.f32 %v1975, %v1975
  %v1977 = vsel %vm168, %v1976, 0.0
  %1978 = vadd.xlane.f32.xlu0 %v1977
  %v1979 = vpop.xlane.xlu0 %1978
  %v1980 = vrot.slane %v1979, 4
  %v1981 = vadd.f32 %v1979, %v1980
  %v1982 = vrot.slane %v1981, 2
  %v1983 = vadd.f32 %v1981, %v1982
  %v1984 = vrot.slane %v1983, 1
  %v1985 = vadd.f32 %v1983, %v1984
  %s1986 = vtos %v1985
  %s1987 = smul.f32 %s1776, 2.0
  %s1988 = ssub.f32 %s1776, 1.0
  %s1989 = sadd.f32 %s1988, 1e-10
  %s1990 = smul.f32 %s1987, %s1989
  %p1991 = scmp.gt.f32.partialorder %s1776, 0.5
  %s1992 = sadd.f32 %s1986, 1e-10
  %s1993 = scalar_select %p1991, %s1990, 1.0
  %v1994 = vstv %s1993
  %v1995 = vrcp.pop %v1994
  %s1996 = vtos %v1995
  %s1997 = smul.f32 %s1992, %s1996
  %s1998 = scalar_select %p1991, %s1997, 0.0
  %v1999 = vand.u32 2147483647, %v1471
  %v2000 = vsel %vm314, %v1999, 0.0
  %2001 = vadd.xlane.f32.xlu0 %v2000
  %v2002 = vpop.xlane.xlu0 %2001
  %v2003 = vrot.slane %v2002, 4
  %v2004 = vadd.f32 %v2002, %v2003
  %v2005 = vrot.slane %v2004, 2
  %v2006 = vadd.f32 %v2004, %v2005
  %v2007 = vrot.slane %v2006, 1
  %v2008 = vadd.f32 %v2006, %v2007
  %s2009 = vtos %v2008
  %v2010 = vstv %s1777
  %v2011 = vrcp.pop %v2010
  %s2012 = vtos %v2011
  %s2013 = smul.f32 %s2009, %s2012
  %s2014 = sadd.f32 %s1792, %s1998
  %s2015 = smul.f32 %s2013, 0.001
  %s2016 = sadd.f32 %s2014, %s2015
  %v2017 = vstv %s2016
  %2018 = vst.msk [vmem:[%s2 + $0x2] sm:$0x1] %vm692, %v2017
  %v2019 = vstv %s1389
  %2020 = vst.msk [vmem:[%s2 + $0x2] sm:$0x1] %vm695, %v2019
  %s2021 = scalar_lea.vmem %s0, 192
  %v2022 = vld [vmem:[%s2021] sm:$0xff]
  %v2023 = vld [vmem:[%s2021 + $0x8] sm:$0xff]
  %v2024 = vld [vmem:[%s2021 + $0x10] sm:$0xff]
  %v2025 = vld [vmem:[%s2021 + $0x18] sm:$0xff]
  %v2026 = vld [vmem:[%s2021 + $0x20] sm:$0xff]
  %v2027 = vld [vmem:[%s2021 + $0x28] sm:$0xff]
  %v2028 = vld [vmem:[%s2021 + $0x30] sm:$0xff]
  %v2029 = vld [vmem:[%s2021 + $0x38] sm:$0xff]
  %s2030 = scalar_lea.vmem %s1, 3
  %v2031 = vld [vmem:[%s2030] sm:$0x1]
  %v2032 = vlaneseq
  %v2033 = vshrl.u32 %v2032, 7
  %v2034 = vsub.s32 0, %v2033
  %v2035 = vrot.slane %v2031, %v2034
  %vm2036 = vcmp.eq.s32.totalorder %v13, %v2035
  %v2037 = vsel %vm2036, 1, 0
  %v2038 = vcvt.s32.f32 %v2037
  %vm2039 = vcmp.gt.s32.totalorder %v2031, 0
  %v2040 = vsel %vm2039, 1, 0
  %v2041 = vcvt.s32.f32 %v2040
  %v2042 = vsel %vm42, %v2041, 0.0
  %2043 = vadd.xlane.f32.xlu0 %v2042
  %v2044 = vpop.xlane.xlu0 %2043
  %v2045 = vrot.slane %v2044, 4
  %v2046 = vadd.f32 %v2044, %v2045
  %v2047 = vrot.slane %v2046, 2
  %v2048 = vadd.f32 %v2046, %v2047
  %v2049 = vrot.slane %v2048, 1
  %v2050 = vadd.f32 %v2048, %v2049
  %s2051 = vtos %v2050
  %v2052 = vsel %vm53, %v2038, 0.0
  %2053 = vadd.xlane.f32.xlu0 %v2052
  %v2054 = vpop.xlane.xlu0 %2053
  %vm2055 = vcmp.gt.f32.partialorder %v2054, 0.0
  %v2056 = vsel %vm2055, 1, 0
  %v2057 = vcvt.s32.f32 %v2056
  %v2058 = vmax.f32 %v2054, 1.0
  %v2059 = vrcp.pop %v2058
  %v2061 = vsel %vm53, %v2038, 0
  %2063 = vmatprep.subr.mxu0 0.0
  %2064 = vmatpush1.msra.mxu0 %v2022
  %2065 = vmatprep.subr.mxu0 0.0
  %2066 = vmatpush1.msra.mxu0 %v2023
  %2067 = vmatprep.subr.mxu0 0.0
  %2068 = vmatpush1.msra.mxu0 %v2024
  %2069 = vmatprep.subr.mxu0 0.0
  %2070 = vmatpush1.msra.mxu0 %v2025
  %2071 = vmatprep.subr.mxu0 0.0
  %2072 = vmatpush1.msra.mxu0 %v2026
  %2073 = vmatprep.subr.mxu0 0.0
  %2074 = vmatpush1.msra.mxu0 %v2027
  %2075 = vmatprep.subr.mxu0 0.0
  %2076 = vmatpush1.msra.mxu0 %v2028
  %2077 = vmatprep.subr.mxu0 0.0
  %2078 = vmatpush1.msra.mxu0 %v2029
  %2079 = vmatprep.subr.mxu0 0.0
  %2080 = vmatpush1.msra.mxu0 0.0
  %2081 = vmatprep.subr.mxu0 0.0
  %2082 = vmatpush1.msra.mxu0 0.0
  %2083 = vmatprep.subr.mxu0 0.0
  %2084 = vmatpush1.msra.mxu0 0.0
  %2085 = vmatprep.subr.mxu0 0.0
  %2086 = vmatpush1.msra.mxu0 0.0
  %2087 = vmatprep.subr.mxu0 0.0
  %2088 = vmatpush1.msra.mxu0 0.0
  %2089 = vmatprep.subr.mxu0 0.0
  %2090 = vmatpush1.msra.mxu0 0.0
  %2091 = vmatprep.subr.mxu0 0.0
  %2092 = vmatpush1.msra.mxu0 0.0
  %2093 = vmatprep.subr.mxu0 0.0
  %2094 = vmatpush1.msra.mxu0 0.0
  %2095 = vmatprep.subr.mxu0 0.0
  %2096 = vmatpush1.msra.mxu0 0.0
  %2097 = vmatprep.subr.mxu0 0.0
  %2098 = vmatpush1.msra.mxu0 0.0
  %2099 = vmatprep.subr.mxu0 0.0
  %2100 = vmatpush1.msra.mxu0 0.0
  %2101 = vmatprep.subr.mxu0 0.0
  %2102 = vmatpush1.msra.mxu0 0.0
  %2103 = vmatprep.subr.mxu0 0.0
  %2104 = vmatpush1.msra.mxu0 0.0
  %2105 = vmatprep.subr.mxu0 0.0
  %2106 = vmatpush1.msra.mxu0 0.0
  %2107 = vmatprep.subr.mxu0 0.0
  %2108 = vmatpush1.msra.mxu0 0.0
  %2109 = vmatprep.subr.mxu0 0.0
  %2110 = vmatpush1.msra.mxu0 0.0
  %2111 = vmatprep.subr.mxu0 0.0
  %2112 = vmatpush1.msra.mxu0 0.0
  %2113 = vmatprep.subr.mxu0 0.0
  %2114 = vmatpush1.msra.mxu0 0.0
  %2115 = vmatprep.subr.mxu0 0.0
  %2116 = vmatpush1.msra.mxu0 0.0
  %2117 = vmatprep.subr.mxu0 0.0
  %2118 = vmatpush1.msra.mxu0 0.0
  %2119 = vmatprep.subr.mxu0 0.0
  %2120 = vmatpush1.msra.mxu0 0.0
  %2121 = vmatprep.subr.mxu0 0.0
  %2122 = vmatpush1.msra.mxu0 0.0
  %2123 = vmatprep.subr.mxu0 0.0
  %2124 = vmatpush1.msra.mxu0 0.0
  %2125 = vmatprep.subr.mxu0 0.0
  %2126 = vmatpush1.msra.mxu0 0.0
  %2127 = vmatprep.mubr.f32.mxu0 0.0
  %2128 = vmatmul.mubr.f32.gmra.mrb[0].mxu0 %v2061
  %v2129 = vpop.f32.mrb[0].mxu0
  %v2130 = vadd.f32 0.0, %v2129
  %v2131 = vpop.f32.mrb[0].mxu0
  %2132 = vdwg.mxu0
  %v2133 = vmul.f32 %v2130, %v2059
  %2134 = vxpose.xlu0.b32.start [1/16] %v2038, 128
  %2135 = vxpose.xlu0.b32.cont [2/16] 0.0, 128
  %2136 = vxpose.xlu0.b32.cont [3/16] 0.0, 128
  %2137 = vxpose.xlu0.b32.cont [4/16] 0.0, 128
  %2138 = vxpose.xlu0.b32.cont [5/16] 0.0, 128
  %2139 = vxpose.xlu0.b32.cont [6/16] 0.0, 128
  %2140 = vxpose.xlu0.b32.cont [7/16] 0.0, 128
  %2141 = vxpose.xlu0.b32.cont [8/16] 0.0, 128
  %2142 = vxpose.xlu0.b32.cont [9/16] 0.0, 128
  %2143 = vxpose.xlu0.b32.cont [10/16] 0.0, 128
  %2144 = vxpose.xlu0.b32.cont [11/16] 0.0, 128
  %2145 = vxpose.xlu0.b32.cont [12/16] 0.0, 128
  %2146 = vxpose.xlu0.b32.cont [13/16] 0.0, 128
  %2147 = vxpose.xlu0.b32.cont [14/16] 0.0, 128
  %2148 = vxpose.xlu0.b32.cont [15/16] 0.0, 128
  %2149 = vxpose.xlu0.b32.end [16/16] 0.0, 128
  %v2150 = vpop.trf.xlu0
  %v2151 = vpop.trf.xlu0
  %v2152 = vpop.trf.xlu0
  %v2153 = vpop.trf.xlu0
  %v2154 = vpop.trf.xlu0
  %v2155 = vpop.trf.xlu0
  %v2156 = vpop.trf.xlu0
  %v2157 = vpop.trf.xlu0
  %v2158 = vpop.trf.xlu0
  %v2159 = vpop.trf.xlu0
  %v2160 = vpop.trf.xlu0
  %v2161 = vpop.trf.xlu0
  %v2162 = vpop.trf.xlu0
  %v2163 = vpop.trf.xlu0
  %v2164 = vpop.trf.xlu0
  %v2165 = vpop.trf.xlu0
  %v2167 = vsel %vm168, %v2150, 0
  %v2170 = vsel %vm168, %v2151, 0
  %v2173 = vsel %vm168, %v2152, 0
  %v2176 = vsel %vm168, %v2153, 0
  %v2179 = vsel %vm168, %v2154, 0
  %v2182 = vsel %vm168, %v2155, 0
  %v2185 = vsel %vm168, %v2156, 0
  %v2188 = vsel %vm168, %v2157, 0
  %2190 = vmatprep.subr.mxu0 0.0
  %2191 = vmatpush1.msra.mxu0 %v2133
  %2192 = vmatprep.subr.mxu0 0.0
  %2193 = vmatpush1.msra.mxu0 0.0
  %2194 = vmatprep.subr.mxu0 0.0
  %2195 = vmatpush1.msra.mxu0 0.0
  %2196 = vmatprep.subr.mxu0 0.0
  %2197 = vmatpush1.msra.mxu0 0.0
  %2198 = vmatprep.subr.mxu0 0.0
  %2199 = vmatpush1.msra.mxu0 0.0
  %2200 = vmatprep.subr.mxu0 0.0
  %2201 = vmatpush1.msra.mxu0 0.0
  %2202 = vmatprep.subr.mxu0 0.0
  %2203 = vmatpush1.msra.mxu0 0.0
  %2204 = vmatprep.subr.mxu0 0.0
  %2205 = vmatpush1.msra.mxu0 0.0
  %2206 = vmatprep.subr.mxu0 0.0
  %2207 = vmatpush1.msra.mxu0 0.0
  %2208 = vmatprep.subr.mxu0 0.0
  %2209 = vmatpush1.msra.mxu0 0.0
  %2210 = vmatprep.subr.mxu0 0.0
  %2211 = vmatpush1.msra.mxu0 0.0
  %2212 = vmatprep.subr.mxu0 0.0
  %2213 = vmatpush1.msra.mxu0 0.0
  %2214 = vmatprep.subr.mxu0 0.0
  %2215 = vmatpush1.msra.mxu0 0.0
  %2216 = vmatprep.subr.mxu0 0.0
  %2217 = vmatpush1.msra.mxu0 0.0
  %2218 = vmatprep.subr.mxu0 0.0
  %2219 = vmatpush1.msra.mxu0 0.0
  %2220 = vmatprep.subr.mxu0 0.0
  %2221 = vmatpush1.msra.mxu0 0.0
  %2222 = vmatprep.subr.mxu0 0.0
  %2223 = vmatpush1.msra.mxu0 0.0
  %2224 = vmatprep.subr.mxu0 0.0
  %2225 = vmatpush1.msra.mxu0 0.0
  %2226 = vmatprep.subr.mxu0 0.0
  %2227 = vmatpush1.msra.mxu0 0.0
  %2228 = vmatprep.subr.mxu0 0.0
  %2229 = vmatpush1.msra.mxu0 0.0
  %2230 = vmatprep.subr.mxu0 0.0
  %2231 = vmatpush1.msra.mxu0 0.0
  %2232 = vmatprep.subr.mxu0 0.0
  %2233 = vmatpush1.msra.mxu0 0.0
  %2234 = vmatprep.subr.mxu0 0.0
  %2235 = vmatpush1.msra.mxu0 0.0
  %2236 = vmatprep.subr.mxu0 0.0
  %2237 = vmatpush1.msra.mxu0 0.0
  %2238 = vmatprep.subr.mxu0 0.0
  %2239 = vmatpush1.msra.mxu0 0.0
  %2240 = vmatprep.subr.mxu0 0.0
  %2241 = vmatpush1.msra.mxu0 0.0
  %2242 = vmatprep.subr.mxu0 0.0
  %2243 = vmatpush1.msra.mxu0 0.0
  %2244 = vmatprep.subr.mxu0 0.0
  %2245 = vmatpush1.msra.mxu0 0.0
  %2246 = vmatprep.subr.mxu0 0.0
  %2247 = vmatpush1.msra.mxu0 0.0
  %2248 = vmatprep.subr.mxu0 0.0
  %2249 = vmatpush1.msra.mxu0 0.0
  %2250 = vmatprep.subr.mxu0 0.0
  %2251 = vmatpush1.msra.mxu0 0.0
  %2252 = vmatprep.subr.mxu0 0.0
  %2253 = vmatpush1.msra.mxu0 0.0
  %2254 = vmatprep.mubr.f32.mxu0 0.0
  %2255 = vmatmul.mubr.f32.gmra.mrb[0].mxu0 %v2167
  %v2256 = vpop.f32.mrb[0].mxu0
  %v2257 = vadd.f32 0.0, %v2256
  %v2258 = vpop.f32.mrb[0].mxu0
  %2259 = vmatprep.mubr.f32.mxu0 0.0
  %2260 = vmatmul.mubr.f32.gmra.mrb[0].mxu0 %v2170
  %v2261 = vpop.f32.mrb[0].mxu0
  %v2262 = vadd.f32 0.0, %v2261
  %v2263 = vpop.f32.mrb[0].mxu0
  %2264 = vmatprep.mubr.f32.mxu0 0.0
  %2265 = vmatmul.mubr.f32.gmra.mrb[0].mxu0 %v2173
  %v2266 = vpop.f32.mrb[0].mxu0
  %v2267 = vadd.f32 0.0, %v2266
  %v2268 = vpop.f32.mrb[0].mxu0
  %2269 = vmatprep.mubr.f32.mxu0 0.0
  %2270 = vmatmul.mubr.f32.gmra.mrb[0].mxu0 %v2176
  %v2271 = vpop.f32.mrb[0].mxu0
  %v2272 = vadd.f32 0.0, %v2271
  %v2273 = vpop.f32.mrb[0].mxu0
  %2274 = vmatprep.mubr.f32.mxu0 0.0
  %2275 = vmatmul.mubr.f32.gmra.mrb[0].mxu0 %v2179
  %v2276 = vpop.f32.mrb[0].mxu0
  %v2277 = vadd.f32 0.0, %v2276
  %v2278 = vpop.f32.mrb[0].mxu0
  %2279 = vmatprep.mubr.f32.mxu0 0.0
  %2280 = vmatmul.mubr.f32.gmra.mrb[0].mxu0 %v2182
  %v2281 = vpop.f32.mrb[0].mxu0
  %v2282 = vadd.f32 0.0, %v2281
  %v2283 = vpop.f32.mrb[0].mxu0
  %2284 = vmatprep.mubr.f32.mxu0 0.0
  %2285 = vmatmul.mubr.f32.gmra.mrb[0].mxu0 %v2185
  %v2286 = vpop.f32.mrb[0].mxu0
  %v2287 = vadd.f32 0.0, %v2286
  %v2288 = vpop.f32.mrb[0].mxu0
  %2289 = vmatprep.mubr.f32.mxu0 0.0
  %2290 = vmatmul.mubr.f32.gmra.mrb[0].mxu0 %v2188
  %v2291 = vpop.f32.mrb[0].mxu0
  %v2292 = vadd.f32 0.0, %v2291
  %v2293 = vpop.f32.mrb[0].mxu0
  %2294 = vdwg.mxu0
  %v2295 = vsub.f32 %v2022, %v2257
  %v2296 = vsub.f32 %v2023, %v2262
  %v2297 = vsub.f32 %v2024, %v2267
  %v2298 = vsub.f32 %v2025, %v2272
  %v2299 = vsub.f32 %v2026, %v2277
  %v2300 = vsub.f32 %v2027, %v2282
  %v2301 = vsub.f32 %v2028, %v2287
  %v2302 = vsub.f32 %v2029, %v2292
  %v2303 = vand.u32 2147483647, %v2295
  %v2304 = vand.u32 2147483647, %v2296
  %v2305 = vand.u32 2147483647, %v2297
  %v2306 = vand.u32 2147483647, %v2298
  %v2307 = vand.u32 2147483647, %v2299
  %v2308 = vand.u32 2147483647, %v2300
  %v2309 = vand.u32 2147483647, %v2301
  %v2310 = vand.u32 2147483647, %v2302
  %v2311 = vsel %vm314, %v2303, 0.0
  %2312 = vadd.xlane.f32.xlu0 %v2311
  %v2313 = vpop.xlane.xlu0 %2312
  %v2314 = vsel %vm314, %v2304, 0.0
  %2315 = vadd.xlane.f32.xlu0 %v2314
  %v2316 = vpop.xlane.xlu0 %2315
  %v2317 = vsel %vm314, %v2305, 0.0
  %2318 = vadd.xlane.f32.xlu0 %v2317
  %v2319 = vpop.xlane.xlu0 %2318
  %v2320 = vsel %vm314, %v2306, 0.0
  %2321 = vadd.xlane.f32.xlu0 %v2320
  %v2322 = vpop.xlane.xlu0 %2321
  %v2323 = vsel %vm314, %v2307, 0.0
  %2324 = vadd.xlane.f32.xlu0 %v2323
  %v2325 = vpop.xlane.xlu0 %2324
  %v2326 = vsel %vm314, %v2308, 0.0
  %2327 = vadd.xlane.f32.xlu0 %v2326
  %v2328 = vpop.xlane.xlu0 %2327
  %v2329 = vsel %vm314, %v2309, 0.0
  %2330 = vadd.xlane.f32.xlu0 %v2329
  %v2331 = vpop.xlane.xlu0 %2330
  %v2332 = vsel %vm314, %v2310, 0.0
  %2333 = vadd.xlane.f32.xlu0 %v2332
  %v2334 = vpop.xlane.xlu0 %2333
  %v2335 = vsub.f32 %v2313, 0.5
  %v2336 = vsub.f32 %v2316, 0.5
  %v2337 = vsub.f32 %v2319, 0.5
  %v2338 = vsub.f32 %v2322, 0.5
  %v2339 = vsub.f32 %v2325, 0.5
  %v2340 = vsub.f32 %v2328, 0.5
  %v2341 = vsub.f32 %v2331, 0.5
  %v2342 = vsub.f32 %v2334, 0.5
  %v2343 = vmax.f32 %v2335, 0.0
  %v2344 = vmax.f32 %v2336, 0.0
  %v2345 = vmax.f32 %v2337, 0.0
  %v2346 = vmax.f32 %v2338, 0.0
  %v2347 = vmax.f32 %v2339, 0.0
  %v2348 = vmax.f32 %v2340, 0.0
  %v2349 = vmax.f32 %v2341, 0.0
  %v2350 = vmax.f32 %v2342, 0.0
  %v2351 = vmul.f32 %v2343, %v2343
  %v2352 = vmul.f32 %v2344, %v2344
  %v2353 = vmul.f32 %v2345, %v2345
  %v2354 = vmul.f32 %v2346, %v2346
  %v2355 = vmul.f32 %v2347, %v2347
  %v2356 = vmul.f32 %v2348, %v2348
  %v2357 = vmul.f32 %v2349, %v2349
  %v2358 = vmul.f32 %v2350, %v2350
  %2359 = vmatprep.subr.mxu0 0.0
  %2360 = vmatpush1.msra.mxu0 %v2351
  %2361 = vmatprep.subr.mxu0 0.0
  %2362 = vmatpush1.msra.mxu0 %v2352
  %2363 = vmatprep.subr.mxu0 0.0
  %2364 = vmatpush1.msra.mxu0 %v2353
  %2365 = vmatprep.subr.mxu0 0.0
  %2366 = vmatpush1.msra.mxu0 %v2354
  %2367 = vmatprep.subr.mxu0 0.0
  %2368 = vmatpush1.msra.mxu0 %v2355
  %2369 = vmatprep.subr.mxu0 0.0
  %2370 = vmatpush1.msra.mxu0 %v2356
  %2371 = vmatprep.subr.mxu0 0.0
  %2372 = vmatpush1.msra.mxu0 %v2357
  %2373 = vmatprep.subr.mxu0 0.0
  %2374 = vmatpush1.msra.mxu0 %v2358
  %2375 = vmatprep.subr.mxu0 0.0
  %2376 = vmatpush1.msra.mxu0 0.0
  %2377 = vmatprep.subr.mxu0 0.0
  %2378 = vmatpush1.msra.mxu0 0.0
  %2379 = vmatprep.subr.mxu0 0.0
  %2380 = vmatpush1.msra.mxu0 0.0
  %2381 = vmatprep.subr.mxu0 0.0
  %2382 = vmatpush1.msra.mxu0 0.0
  %2383 = vmatprep.subr.mxu0 0.0
  %2384 = vmatpush1.msra.mxu0 0.0
  %2385 = vmatprep.subr.mxu0 0.0
  %2386 = vmatpush1.msra.mxu0 0.0
  %2387 = vmatprep.subr.mxu0 0.0
  %2388 = vmatpush1.msra.mxu0 0.0
  %2389 = vmatprep.subr.mxu0 0.0
  %2390 = vmatpush1.msra.mxu0 0.0
  %2391 = vmatprep.subr.mxu0 0.0
  %2392 = vmatpush1.msra.mxu0 0.0
  %2393 = vmatprep.subr.mxu0 0.0
  %2394 = vmatpush1.msra.mxu0 0.0
  %2395 = vmatprep.subr.mxu0 0.0
  %2396 = vmatpush1.msra.mxu0 0.0
  %2397 = vmatprep.subr.mxu0 0.0
  %2398 = vmatpush1.msra.mxu0 0.0
  %2399 = vmatprep.subr.mxu0 0.0
  %2400 = vmatpush1.msra.mxu0 0.0
  %2401 = vmatprep.subr.mxu0 0.0
  %2402 = vmatpush1.msra.mxu0 0.0
  %2403 = vmatprep.subr.mxu0 0.0
  %2404 = vmatpush1.msra.mxu0 0.0
  %2405 = vmatprep.subr.mxu0 0.0
  %2406 = vmatpush1.msra.mxu0 0.0
  %2407 = vmatprep.subr.mxu0 0.0
  %2408 = vmatpush1.msra.mxu0 0.0
  %2409 = vmatprep.subr.mxu0 0.0
  %2410 = vmatpush1.msra.mxu0 0.0
  %2411 = vmatprep.subr.mxu0 0.0
  %2412 = vmatpush1.msra.mxu0 0.0
  %2413 = vmatprep.subr.mxu0 0.0
  %2414 = vmatpush1.msra.mxu0 0.0
  %2415 = vmatprep.subr.mxu0 0.0
  %2416 = vmatpush1.msra.mxu0 0.0
  %2417 = vmatprep.subr.mxu0 0.0
  %2418 = vmatpush1.msra.mxu0 0.0
  %2419 = vmatprep.subr.mxu0 0.0
  %2420 = vmatpush1.msra.mxu0 0.0
  %2421 = vmatprep.subr.mxu0 0.0
  %2422 = vmatpush1.msra.mxu0 0.0
  %2423 = vmatprep.mubr.f32.mxu0 0.0
  %2424 = vmatmul.mubr.f32.gmra.mrb[0].mxu0 %v2061
  %v2425 = vpop.f32.mrb[0].mxu0
  %v2426 = vadd.f32 0.0, %v2425
  %v2427 = vpop.f32.mrb[0].mxu0
  %2428 = vdwg.mxu0
  %v2429 = vsel %vm433, %v2057, 0.0
  %2430 = vadd.xlane.f32.xlu0 %v2429
  %v2431 = vpop.xlane.xlu0 %2430
  %v2432 = vrot.slane %v2431, 4
  %v2433 = vadd.f32 %v2431, %v2432
  %v2434 = vrot.slane %v2433, 2
  %v2435 = vadd.f32 %v2433, %v2434
  %v2436 = vrot.slane %v2435, 1
  %v2437 = vadd.f32 %v2435, %v2436
  %s2438 = vtos %v2437
  %s2439 = smax.f32 %s2438, 1.0
  %v2440 = vmul.f32 %v2426, %v2059
  %v2441 = vsel %vm433, %v2440, 0.0
  %2442 = vadd.xlane.f32.xlu0 %v2441
  %v2443 = vpop.xlane.xlu0 %2442
  %v2444 = vrot.slane %v2443, 4
  %v2445 = vadd.f32 %v2443, %v2444
  %v2446 = vrot.slane %v2445, 2
  %v2447 = vadd.f32 %v2445, %v2446
  %v2448 = vrot.slane %v2447, 1
  %v2449 = vadd.f32 %v2447, %v2448
  %s2450 = vtos %v2449
  %v2451 = vstv %s2439
  %v2452 = vrcp.pop %v2451
  %s2453 = vtos %v2452
  %s2454 = smul.f32 %s2450, %s2453
  %v2455 = vsub.f32 1.0, %v2057
  %v2456 = vmul.f32 %v2455, %v22
  %v2457 = vadd.f32 %v2133, %v2456
  %v2459 = vcombine.high %v2457, %v2457
  %v2461 = vunpack.c.l.s4 1966171168
  %v2462 = vunpack.c.0.s8 %v2461
  %v2463 = vlaneseq
  %v2464 = vshrl.u32 %v2463, 7
  %v2465 = vsub.s32 %v2462, %v2464
  %v2466 = vrot.slane %v2457, %v2465
  %v2468 = vunpack.c.l.s4 1966171168
  %v2469 = vunpack.c.0.s8 %v2468
  %v2470 = vlaneseq
  %v2471 = vshrl.u32 %v2470, 7
  %v2472 = vsub.s32 %v2469, %v2471
  %v2473 = vrot.slane %v2459, %v2472
  %v2474 = vcombine.high %v2466, %v2466
  %v2475 = vcombine.high %v2473, %v2473
  %v2477 = vunpack.c.l.s4 1966171168
  %v2478 = vunpack.c.0.s8 %v2477
  %v2479 = vlaneseq
  %v2480 = vshrl.u32 %v2479, 7
  %v2481 = vsub.s32 %v2478, %v2480
  %v2482 = vrot.slane %v2466, %v2481
  %v2484 = vunpack.c.l.s4 1966171168
  %v2485 = vunpack.c.0.s8 %v2484
  %v2486 = vlaneseq
  %v2487 = vshrl.u32 %v2486, 7
  %v2488 = vsub.s32 %v2485, %v2487
  %v2489 = vrot.slane %v2473, %v2488
  %v2491 = vunpack.c.l.s4 1966171168
  %v2492 = vunpack.c.0.s8 %v2491
  %v2493 = vlaneseq
  %v2494 = vshrl.u32 %v2493, 7
  %v2495 = vsub.s32 %v2492, %v2494
  %v2496 = vrot.slane %v2474, %v2495
  %v2498 = vunpack.c.l.s4 1966171168
  %v2499 = vunpack.c.0.s8 %v2498
  %v2500 = vlaneseq
  %v2501 = vshrl.u32 %v2500, 7
  %v2502 = vsub.s32 %v2499, %v2501
  %v2503 = vrot.slane %v2475, %v2502
  %v2504 = vcombine.high %v2482, %v2482
  %v2505 = vcombine.high %v2489, %v2489
  %v2506 = vcombine.high %v2496, %v2496
  %v2507 = vcombine.high %v2503, %v2503
  %v2508 = vlaneseq
  %v2509 = vshrl.u32 %v2508, 7
  %v2510 = vsub.s32 0, %v2509
  %v2511 = vrot.slane %v2482, %v2510
  %v2512 = vlaneseq
  %v2513 = vshrl.u32 %v2512, 7
  %v2514 = vsub.s32 0, %v2513
  %v2515 = vrot.slane %v2496, %v2514
  %v2516 = vlaneseq
  %v2517 = vshrl.u32 %v2516, 7
  %v2518 = vsub.s32 0, %v2517
  %v2519 = vrot.slane %v2504, %v2518
  %v2520 = vlaneseq
  %v2521 = vshrl.u32 %v2520, 7
  %v2522 = vsub.s32 0, %v2521
  %v2523 = vrot.slane %v2506, %v2522
  %v2524 = vlaneseq
  %v2525 = vshrl.u32 %v2524, 7
  %v2526 = vsub.s32 0, %v2525
  %v2527 = vrot.slane %v2489, %v2526
  %v2528 = vlaneseq
  %v2529 = vshrl.u32 %v2528, 7
  %v2530 = vsub.s32 0, %v2529
  %v2531 = vrot.slane %v2503, %v2530
  %v2532 = vlaneseq
  %v2533 = vshrl.u32 %v2532, 7
  %v2534 = vsub.s32 0, %v2533
  %v2535 = vrot.slane %v2505, %v2534
  %v2536 = vlaneseq
  %v2537 = vshrl.u32 %v2536, 7
  %v2538 = vsub.s32 0, %v2537
  %v2539 = vrot.slane %v2507, %v2538
  %v2548 = vsub.f32 %v2511, %v2457
  %v2549 = vsub.f32 %v2515, %v2457
  %v2550 = vsub.f32 %v2519, %v2457
  %v2551 = vsub.f32 %v2523, %v2457
  %v2552 = vsub.f32 %v2527, %v2457
  %v2553 = vsub.f32 %v2531, %v2457
  %v2554 = vsub.f32 %v2535, %v2457
  %v2555 = vsub.f32 %v2539, %v2457
  %v2556 = vand.u32 2147483647, %v2548
  %v2557 = vand.u32 2147483647, %v2549
  %v2558 = vand.u32 2147483647, %v2550
  %v2559 = vand.u32 2147483647, %v2551
  %v2560 = vand.u32 2147483647, %v2552
  %v2561 = vand.u32 2147483647, %v2553
  %v2562 = vand.u32 2147483647, %v2554
  %v2563 = vand.u32 2147483647, %v2555
  %v2564 = vsel %vm314, %v2556, 0.0
  %2565 = vadd.xlane.f32.xlu0 %v2564
  %v2566 = vpop.xlane.xlu0 %2565
  %v2567 = vsel %vm314, %v2557, 0.0
  %2568 = vadd.xlane.f32.xlu0 %v2567
  %v2569 = vpop.xlane.xlu0 %2568
  %v2570 = vsel %vm314, %v2558, 0.0
  %2571 = vadd.xlane.f32.xlu0 %v2570
  %v2572 = vpop.xlane.xlu0 %2571
  %v2573 = vsel %vm314, %v2559, 0.0
  %2574 = vadd.xlane.f32.xlu0 %v2573
  %v2575 = vpop.xlane.xlu0 %2574
  %v2576 = vsel %vm314, %v2560, 0.0
  %2577 = vadd.xlane.f32.xlu0 %v2576
  %v2578 = vpop.xlane.xlu0 %2577
  %v2579 = vsel %vm314, %v2561, 0.0
  %2580 = vadd.xlane.f32.xlu0 %v2579
  %v2581 = vpop.xlane.xlu0 %2580
  %v2582 = vsel %vm314, %v2562, 0.0
  %2583 = vadd.xlane.f32.xlu0 %v2582
  %v2584 = vpop.xlane.xlu0 %2583
  %v2585 = vsel %vm314, %v2563, 0.0
  %2586 = vadd.xlane.f32.xlu0 %v2585
  %v2587 = vpop.xlane.xlu0 %2586
  %v2596 = vlaneseq
  %v2597 = vshrl.u32 %v2596, 7
  %v2598 = vsub.s32 %v15, %v2597
  %v2599 = vrot.slane %v2566, %v2598
  %v2600 = vlaneseq
  %v2601 = vshrl.u32 %v2600, 7
  %v2602 = vsub.s32 %v15, %v2601
  %v2603 = vrot.slane %v2569, %v2602
  %v2604 = vlaneseq
  %v2605 = vshrl.u32 %v2604, 7
  %v2606 = vsub.s32 %v15, %v2605
  %v2607 = vrot.slane %v2572, %v2606
  %v2608 = vlaneseq
  %v2609 = vshrl.u32 %v2608, 7
  %v2610 = vsub.s32 %v15, %v2609
  %v2611 = vrot.slane %v2575, %v2610
  %v2612 = vlaneseq
  %v2613 = vshrl.u32 %v2612, 7
  %v2614 = vsub.s32 %v15, %v2613
  %v2615 = vrot.slane %v2578, %v2614
  %v2616 = vlaneseq
  %v2617 = vshrl.u32 %v2616, 7
  %v2618 = vsub.s32 %v15, %v2617
  %v2619 = vrot.slane %v2581, %v2618
  %v2620 = vlaneseq
  %v2621 = vshrl.u32 %v2620, 7
  %v2622 = vsub.s32 %v15, %v2621
  %v2623 = vrot.slane %v2584, %v2622
  %v2624 = vlaneseq
  %v2625 = vshrl.u32 %v2624, 7
  %v2626 = vsub.s32 %v15, %v2625
  %v2627 = vrot.slane %v2587, %v2626
  %v2628 = vsel %vm633, %v2603, %v2599
  %v2629 = vsel %vm635, %v2607, %v2628
  %v2630 = vsel %vm637, %v2611, %v2629
  %v2631 = vsel %vm639, %v2615, %v2630
  %v2632 = vsel %vm641, %v2619, %v2631
  %v2633 = vsel %vm643, %v2623, %v2632
  %v2634 = vsel %vm645, %v2627, %v2633
  %v2636 = vsub.f32 %v19, %v2634
  %v2637 = vmax.f32 %v2636, 0.0
  %v2638 = vmul.f32 %v2637, %v2637
  %v2639 = vsel %vm168, %v2638, 0.0
  %2640 = vadd.xlane.f32.xlu0 %v2639
  %v2641 = vpop.xlane.xlu0 %2640
  %v2642 = vrot.slane %v2641, 4
  %v2643 = vadd.f32 %v2641, %v2642
  %v2644 = vrot.slane %v2643, 2
  %v2645 = vadd.f32 %v2643, %v2644
  %v2646 = vrot.slane %v2645, 1
  %v2647 = vadd.f32 %v2645, %v2646
  %s2648 = vtos %v2647
  %s2649 = smul.f32 %s2438, 2.0
  %s2650 = ssub.f32 %s2438, 1.0
  %s2651 = sadd.f32 %s2650, 1e-10
  %s2652 = smul.f32 %s2649, %s2651
  %p2653 = scmp.gt.f32.partialorder %s2438, 0.5
  %s2654 = sadd.f32 %s2648, 1e-10
  %s2655 = scalar_select %p2653, %s2652, 1.0
  %v2656 = vstv %s2655
  %v2657 = vrcp.pop %v2656
  %s2658 = vtos %v2657
  %s2659 = smul.f32 %s2654, %s2658
  %s2660 = scalar_select %p2653, %s2659, 0.0
  %v2661 = vand.u32 2147483647, %v2133
  %v2662 = vsel %vm314, %v2661, 0.0
  %2663 = vadd.xlane.f32.xlu0 %v2662
  %v2664 = vpop.xlane.xlu0 %2663
  %v2665 = vrot.slane %v2664, 4
  %v2666 = vadd.f32 %v2664, %v2665
  %v2667 = vrot.slane %v2666, 2
  %v2668 = vadd.f32 %v2666, %v2667
  %v2669 = vrot.slane %v2668, 1
  %v2670 = vadd.f32 %v2668, %v2669
  %s2671 = vtos %v2670
  %v2672 = vstv %s2439
  %v2673 = vrcp.pop %v2672
  %s2674 = vtos %v2673
  %s2675 = smul.f32 %s2671, %s2674
  %s2676 = sadd.f32 %s2454, %s2660
  %s2677 = smul.f32 %s2675, 0.001
  %s2678 = sadd.f32 %s2676, %s2677
  %v2679 = vstv %s2678
  %2680 = vst.msk [vmem:[%s2 + $0x3] sm:$0x1] %vm692, %v2679
  %v2681 = vstv %s2051
  %2682 = vst.msk [vmem:[%s2 + $0x3] sm:$0x1] %vm695, %v2681
  // Predicated region
  $region10: #{tpu_custom_call.1} parent=0 // pred_check
    _
  $region11: #{tpu_custom_call.1} parent=0 // pred_check_branch
    %2684 = sbr.rel (0) target = $region13
  $region12: #{tpu_custom_call.1} parent=0 // pred_region
    _
  $region13: #{tpu_custom_call.1} parent=0 // pred_fallthru
    _
  // Predicated region
  $region14: #{tpu_custom_call.1} parent=0 // pred_check
    _
  $region15: #{tpu_custom_call.1} parent=0 // pred_check_branch
    %2686 = sbr.rel (0) target = $region17
  $region16: #{tpu_custom_call.1} parent=0 // pred_region
    _
  $region17: #{tpu_custom_call.1} parent=0 // pred_fallthru
    _

</llo_original>
